<compile_context>
chip_gen: v7x
topology: tpu7x:2x2x1
jax: 0.10.0
libtpu: 0.0.40
codegen_flags: <defaults>
</compile_context>

<pallas_src>
import math
import numpy as np

import jax
import jax.numpy as jnp
from jax import lax
from jax.experimental import pallas as pl
from jax.experimental.pallas import tpu as pltpu

NUM_CATF = 32                    # categorical features
NUM_CATE = 52                    # categories per feature
NUM_CONF = 9                     # continuous features
NTOK = NUM_CATF * NUM_CATE       # 1664 embedding rows
EMB = 64                         # embedding_dim == hidden_size
HID = 64                         # hidden_size
CAT_H1 = 256                     # mlp_cat first hidden width
NUM_CLASSES = 2
OUT_PAD = 128                    # lane-dense output width (wrapper slices [:, :2])
BN_EPS = 1e-5
NEG_BIG = -1e30                  # masks padded logit lanes (exp underflows to 0)

CENSUS_CATEGORY = [9, 17, 3, 7, 24, 15, 5, 10, 2, 3, 6, 8, 6, 6, 51, 38,
                   8, 10, 9, 10, 3, 4, 7, 5, 43, 43, 43, 5, 3, 3, 3, 2]


def _round_up(x, m):
    return (x + m - 1) // m * m


# ----------------------------- Pallas kernel ---------------------------------
def mlp_kernel(xcat_ref, xcon_ref,
               m_ref, b1_ref, w2_ref, b2_ref,
               wc1_ref, bc1_ref, wc2_ref, bc2_ref,
               wcls_ref, bcls_ref,
               out_ref):
    f32 = jnp.float32

    # --- categorical branch ---------------------------------------------------
    # (x_cat * emb -> per-feature sum -> Linear(2048,256) -> BN) fused into m_ref/b1_ref.
    h = jnp.dot(xcat_ref[...], m_ref[...], preferred_element_type=f32) + b1_ref[...]
    h = jnp.maximum(h, 0.0)                                                # (TB, 256)
    h = jnp.dot(h, w2_ref[...], preferred_element_type=f32) + b2_ref[...]  # Linear+BN folded
    hcat = jnp.maximum(h, 0.0)                                             # (TB, 64)

    # --- continuous branch ------------------------------------------------------
    g = jnp.dot(xcon_ref[...], wc1_ref[...], preferred_element_type=f32) + bc1_ref[...]
    g = jnp.maximum(g, 0.0)
    g = jnp.dot(g, wc2_ref[...], preferred_element_type=f32) + bc2_ref[...]
    hcon = jnp.maximum(g, 0.0)                                             # (TB, 64)

    # --- classifier over concat((con, cat)) as a split matmul + masked softmax ---
    logits = (jnp.dot(hcon, wcls_ref[0:HID, :], preferred_element_type=f32)
              + jnp.dot(hcat, wcls_ref[HID:2 * HID, :], preferred_element_type=f32)
              + bcls_ref[...])                                             # (TB, 128)

    lane = lax.broadcasted_iota(jnp.int32, logits.shape, 1)
    logits = jnp.where(lane < NUM_CLASSES, logits, f32(NEG_BIG))
    mx = jnp.max(logits, axis=-1, keepdims=True)
    e = jnp.exp(logits - mx)
    out_ref[...] = e / jnp.sum(e, axis=-1, keepdims=True)


# ----------------------- one-time parameter preparation -----------------------
def prepare_kernel_params(p):
    """Hoist all batch-invariant work out of the kernel (run once per model)."""
    f32 = jnp.float32

    # embedding max_norm=1.0: torch.embedding_renorm_ rescales rows with norm > 1.
    w = p["emb_w"].astype(f32)
    norm = jnp.sqrt(jnp.sum(w * w, axis=-1, keepdims=True))
    w = w * jnp.where(norm > 1.0, 1.0 / (norm + 1e-7), f32(1.0))

    # Fold inference-mode BatchNorm1d (running stats) into the preceding Linear.
    # TODO(synk): training-mode BatchNorm (batch statistics) is not implemented.
    def fold(wt, b, g, beta, mean, var):
        s = g / jnp.sqrt(var + BN_EPS)
        return wt * s[None, :], (b - mean) * s + beta

    w1, b1 = fold(p["cat_w1"], p["cat_b1"], p["bn1_g"], p["bn1_b"], p["bn1_m"], p["bn1_v"])
    w2, b2 = fold(p["cat_w2"], p["cat_b2"], p["bn2_g"], p["bn2_b"], p["bn2_m"], p["bn2_v"])
    wc1, bc1 = fold(p["con_w1"], p["con_b1"], p["bnc1_g"], p["bnc1_b"], p["bnc1_m"], p["bnc1_v"])
    wc2, bc2 = fold(p["con_w2"], p["con_b2"], p["bnc2_g"], p["bnc2_b"], p["bnc2_m"], p["bnc2_v"])

    # Fuse the per-feature embedding reduction with the (BN-folded) Linear(2048, 256):
    #   M[f*52 + j, n] = sum_d emb[f*52 + j, d] * W1[f*64 + d, n]
    M = jnp.einsum("fjd,fdn->fjn",
                   w.reshape(NUM_CATF, NUM_CATE, EMB),
                   w1.reshape(NUM_CATF, EMB, CAT_H1)).reshape(NTOK, CAT_H1)

    # Pad the 2-class classifier to OUT_PAD lanes for lane-dense output stores.
    wcls = jnp.zeros((2 * HID, OUT_PAD), f32).at[:, :NUM_CLASSES].set(p["cls_w"].astype(f32))
    bcls = jnp.zeros((1, OUT_PAD), f32).at[:, :NUM_CLASSES].set(p["cls_b"].astype(f32)[None, :])

    return dict(
        M=M, b1=b1.reshape(1, CAT_H1), w2=w2, b2=b2.reshape(1, HID),
        wc1=wc1, bc1=bc1.reshape(1, HID), wc2=wc2, bc2=bc2.reshape(1, HID),
        wcls=wcls, bcls=bcls)


# --------------------------------- wrapper ------------------------------------
def mlp_forward(x_con, x_cat, kp, tile_b=128):
    B = x_con.shape[0]
    xc = x_cat.reshape(B, NTOK).astype(jnp.float32)       # flatten(start_dim=1, end_dim=2)
    xn = x_con.reshape(B, NUM_CONF).astype(jnp.float32)

    tb = min(tile_b, _round_up(max(B, 1), 8))             # sublane-aligned batch tile
    Bp = _round_up(B, tb)
    if Bp != B:
        xc = jnp.pad(xc, ((0, Bp - B), (0, 0)))
        xn = jnp.pad(xn, ((0, Bp - B), (0, 0)))

    def const_spec(arr):                                   # weights resident across steps
        return pl.BlockSpec(arr.shape, lambda i: (0, 0))

    weights = [kp["M"], kp["b1"], kp["w2"], kp["b2"],
               kp["wc1"], kp["bc1"], kp["wc2"], kp["bc2"],
               kp["wcls"], kp["bcls"]]

    out = pl.pallas_call(
        mlp_kernel,
        out_shape=jax.ShapeDtypeStruct((Bp, OUT_PAD), jnp.float32),
        grid=(Bp // tb,),
        in_specs=[pl.BlockSpec((tb, NTOK), lambda i: (i, 0)),
                  pl.BlockSpec((tb, NUM_CONF), lambda i: (i, 0))]
                 + [const_spec(a) for a in weights],
        out_specs=pl.BlockSpec((tb, OUT_PAD), lambda i: (i, 0)),
        compiler_params=pltpu.CompilerParams(dimension_semantics=("parallel",)),
    )(xc, xn, *weights)
    return out[:B, :NUM_CLASSES]


# ------------------------------ init & reference -------------------------------
def init_params(key):
    ks = iter(jax.random.split(key, 16))
    f32 = jnp.float32

    def lin(fan_in, shape):
        b = 1.0 / math.sqrt(fan_in)
        return jax.random.uniform(next(ks), shape, f32, -b, b)

    emb = jax.random.normal(next(ks), (NTOK, EMB), f32)
    valid = np.zeros((NUM_CATF, NUM_CATE), np.float32)
    for i, c in enumerate(CENSUS_CATEGORY):
        valid[i, :c] = 1.0
    emb = emb * jnp.asarray(valid.reshape(NTOK, 1))        # embedding.weight[empty_list] = 0

    def bn(c):                                             # gamma, beta, running_mean, running_var
        return (jnp.ones((c,), f32), jnp.zeros((c,), f32),
                jnp.zeros((c,), f32), jnp.ones((c,), f32))

    bn1, bn2, bnc1, bnc2 = bn(CAT_H1), bn(HID), bn(HID), bn(HID)

    return dict(
        emb_w=emb,
        cat_w1=lin(NUM_CATF * HID, (NUM_CATF * HID, CAT_H1)),
        cat_b1=lin(NUM_CATF * HID, (CAT_H1,)),
        bn1_g=bn1[0], bn1_b=bn1[1], bn1_m=bn1[2], bn1_v=bn1[3],
        cat_w2=lin(CAT_H1, (CAT_H1, HID)), cat_b2=lin(CAT_H1, (HID,)),
        bn2_g=bn2[0], bn2_b=bn2[1], bn2_m=bn2[2], bn2_v=bn2[3],
        con_w1=lin(NUM_CONF, (NUM_CONF, HID)), con_b1=lin(NUM_CONF, (HID,)),
        bnc1_g=bnc1[0], bnc1_b=bnc1[1], bnc1_m=bnc1[2], bnc1_v=bnc1[3],
        con_w2=lin(HID, (HID, HID)), con_b2=lin(HID, (HID,)),
        bnc2_g=bnc2[0], bnc2_b=bnc2[1], bnc2_m=bnc2[2], bnc2_v=bnc2[3],
        cls_w=lin(2 * HID, (2 * HID, NUM_CLASSES)),
        cls_b=lin(2 * HID, (NUM_CLASSES,)))


def mlp_reference(x_con, x_cat, p):
    """Pure-jnp reference following the unfused PyTorch forward (eval mode)."""
    f32 = jnp.float32
    w = p["emb_w"].astype(f32)
    norm = jnp.sqrt(jnp.sum(w * w, axis=-1, keepdims=True))
    w = w * jnp.where(norm > 1.0, 1.0 / (norm + 1e-7), f32(1.0))

    B = x_con.shape[0]
    xc = x_cat.reshape(B, NTOK, 1).astype(f32) * w[None]                   # (B,1664,64)
    xc = xc.reshape(B, NUM_CATF, NUM_CATE, EMB).sum(axis=2).reshape(B, NUM_CATF * EMB)

    def bn(x, g, b, m, v):
        return (x - m) / jnp.sqrt(v + BN_EPS) * g + b

    h = xc @ p["cat_w1"] + p["cat_b1"]
    h = jax.nn.relu(bn(h, p["bn1_g"], p["bn1_b"], p["bn1_m"], p["bn1_v"]))
    h = h @ p["cat_w2"] + p["cat_b2"]
    hcat = jax.nn.relu(bn(h, p["bn2_g"], p["bn2_b"], p["bn2_m"], p["bn2_v"]))

    g = x_con.astype(f32) @ p["con_w1"] + p["con_b1"]
    g = jax.nn.relu(bn(g, p["bnc1_g"], p["bnc1_b"], p["bnc1_m"], p["bnc1_v"]))
    g = g @ p["con_w2"] + p["con_b2"]
    hcon = jax.nn.relu(bn(g, p["bnc2_g"], p["bnc2_b"], p["bnc2_m"], p["bnc2_v"]))

    logits = jnp.concatenate([hcon, hcat], axis=1) @ p["cls_w"] + p["cls_b"]
    return jax.nn.softmax(logits, axis=1)


if __name__ == "__main__":
    root = jax.random.PRNGKey(0)
    kparam, kcon, kcat = jax.random.split(root, 3)
    params = init_params(kparam)
    kparams = prepare_kernel_params(params)

    B = 4
    x_con = jax.random.normal(kcon, (B, NUM_CONF), jnp.float32)            # (4, 9)
    idx = jax.random.randint(kcat, (B, NUM_CATF), 0, NUM_CATE)
    x_cat = jax.nn.one_hot(idx, NUM_CATE, dtype=jnp.float32)               # (4, 32, 52)

    out = mlp_forward(x_con, x_cat, kparams)
    out = jax.block_until_ready(out)

    assert out.shape == (B, NUM_CLASSES)
    assert bool(jnp.all(jnp.isfinite(out)))
    assert bool(jnp.allclose(jnp.sum(out, axis=1), 1.0, atol=1e-3))        # rows are softmax

    ref = mlp_reference(x_con, x_cat, params)
    assert float(jnp.max(jnp.abs(out - ref))) < 1e-2

    print("KERNEL_OK")
</pallas_src>

<mosaic_0001>
module attributes {stable_mosaic.version = 11 : i64} {
  func.func @mlp_kernel(%arg0: i32, %arg1: memref<8x1664xf32, #tpu.memory_space<vmem>>, %arg2: memref<8x9xf32, #tpu.memory_space<vmem>>, %arg3: memref<1664x256xf32, #tpu.memory_space<vmem>>, %arg4: memref<1x256xf32, #tpu.memory_space<vmem>>, %arg5: memref<256x64xf32, #tpu.memory_space<vmem>>, %arg6: memref<1x64xf32, #tpu.memory_space<vmem>>, %arg7: memref<9x64xf32, #tpu.memory_space<vmem>>, %arg8: memref<1x64xf32, #tpu.memory_space<vmem>>, %arg9: memref<64x64xf32, #tpu.memory_space<vmem>>, %arg10: memref<1x64xf32, #tpu.memory_space<vmem>>, %arg11: memref<128x128xf32, #tpu.memory_space<vmem>>, %arg12: memref<1x128xf32, #tpu.memory_space<vmem>>, %arg13: memref<8x128xf32, #tpu.memory_space<vmem>>) attributes {dimension_semantics = [#tpu.dimension_semantics<parallel>], iteration_bounds = array<i64: 1>, scalar_prefetch = 0 : i64, scratch_operands = 0 : i64, tpu.core_type = #tpu.core_type<tc>, window_params = [{transform_indices = @transform_0, window_bounds = array<i64: 8, 1664>}, {transform_indices = @transform_1, window_bounds = array<i64: 8, 9>}, {pipeline_mode = #tpu.pipeline_mode<synchronous>, transform_indices = @transform_2, window_bounds = array<i64: 1664, 256>}, {pipeline_mode = #tpu.pipeline_mode<synchronous>, transform_indices = @transform_3, window_bounds = array<i64: 1, 256>}, {pipeline_mode = #tpu.pipeline_mode<synchronous>, transform_indices = @transform_4, window_bounds = array<i64: 256, 64>}, {pipeline_mode = #tpu.pipeline_mode<synchronous>, transform_indices = @transform_5, window_bounds = array<i64: 1, 64>}, {pipeline_mode = #tpu.pipeline_mode<synchronous>, transform_indices = @transform_6, window_bounds = array<i64: 9, 64>}, {pipeline_mode = #tpu.pipeline_mode<synchronous>, transform_indices = @transform_7, window_bounds = array<i64: 1, 64>}, {pipeline_mode = #tpu.pipeline_mode<synchronous>, transform_indices = @transform_8, window_bounds = array<i64: 64, 64>}, {pipeline_mode = #tpu.pipeline_mode<synchronous>, transform_indices = @transform_9, window_bounds = array<i64: 1, 64>}, {pipeline_mode = #tpu.pipeline_mode<synchronous>, transform_indices = @transform_10, window_bounds = array<i64: 128, 128>}, {pipeline_mode = #tpu.pipeline_mode<synchronous>, transform_indices = @transform_11, window_bounds = array<i64: 1, 128>}, {transform_indices = @transform_12, window_bounds = array<i64: 8, 128>}]} {
    %c0 = arith.constant 0 : index
    %c0_0 = arith.constant 0 : index
    %0 = vector.load %arg1[%c0, %c0_0] : memref<8x1664xf32, #tpu.memory_space<vmem>>, vector<8x1664xf32>
    %c0_1 = arith.constant 0 : index
    %c0_2 = arith.constant 0 : index
    %1 = vector.load %arg3[%c0_1, %c0_2] : memref<1664x256xf32, #tpu.memory_space<vmem>>, vector<1664x256xf32>
    %cst = arith.constant dense<0.000000e+00> : vector<8x256xf32>
    %2 = tpu.matmul %0, %1, %cst {dimension_numbers = #tpu.dot_dimension_numbers<[1], [0], [0], [1], [0, 0, 1, 1], [], []>} : vector<8x1664xf32>, vector<1664x256xf32>, vector<8x256xf32> -> vector<8x256xf32>
    %c0_3 = arith.constant 0 : index
    %c0_4 = arith.constant 0 : index
    %3 = vector.load %arg4[%c0_3, %c0_4] : memref<1x256xf32, #tpu.memory_space<vmem>>, vector<1x256xf32>
    %4 = vector.broadcast %3 : vector<1x256xf32> to vector<8x256xf32>
    %5 = arith.addf %2, %4 : vector<8x256xf32>
    %cst_5 = arith.constant 0.000000e+00 : f32
    %6 = vector.broadcast %cst_5 : f32 to vector<8x256xf32>
    %7 = arith.maximumf %5, %6 : vector<8x256xf32>
    %c0_6 = arith.constant 0 : index
    %c0_7 = arith.constant 0 : index
    %8 = vector.load %arg5[%c0_6, %c0_7] : memref<256x64xf32, #tpu.memory_space<vmem>>, vector<256x64xf32>
    %cst_8 = arith.constant dense<0.000000e+00> : vector<8x64xf32>
    %9 = tpu.matmul %7, %8, %cst_8 {dimension_numbers = #tpu.dot_dimension_numbers<[1], [0], [0], [1], [0, 0, 1, 1], [], []>} : vector<8x256xf32>, vector<256x64xf32>, vector<8x64xf32> -> vector<8x64xf32>
    %c0_9 = arith.constant 0 : index
    %c0_10 = arith.constant 0 : index
    %10 = vector.load %arg6[%c0_9, %c0_10] : memref<1x64xf32, #tpu.memory_space<vmem>>, vector<1x64xf32>
    %11 = vector.broadcast %10 : vector<1x64xf32> to vector<8x64xf32>
    %12 = arith.addf %9, %11 : vector<8x64xf32>
    %cst_11 = arith.constant 0.000000e+00 : f32
    %13 = vector.broadcast %cst_11 : f32 to vector<8x64xf32>
    %14 = arith.maximumf %12, %13 : vector<8x64xf32>
    %c0_12 = arith.constant 0 : index
    %c0_13 = arith.constant 0 : index
    %15 = vector.load %arg2[%c0_12, %c0_13] : memref<8x9xf32, #tpu.memory_space<vmem>>, vector<8x9xf32>
    %c0_14 = arith.constant 0 : index
    %c0_15 = arith.constant 0 : index
    %16 = vector.load %arg7[%c0_14, %c0_15] : memref<9x64xf32, #tpu.memory_space<vmem>>, vector<9x64xf32>
    %cst_16 = arith.constant dense<0.000000e+00> : vector<8x64xf32>
    %17 = tpu.matmul %15, %16, %cst_16 {dimension_numbers = #tpu.dot_dimension_numbers<[1], [0], [0], [1], [0, 0, 1, 1], [], []>} : vector<8x9xf32>, vector<9x64xf32>, vector<8x64xf32> -> vector<8x64xf32>
    %c0_17 = arith.constant 0 : index
    %c0_18 = arith.constant 0 : index
    %18 = vector.load %arg8[%c0_17, %c0_18] : memref<1x64xf32, #tpu.memory_space<vmem>>, vector<1x64xf32>
    %19 = vector.broadcast %18 : vector<1x64xf32> to vector<8x64xf32>
    %20 = arith.addf %17, %19 : vector<8x64xf32>
    %cst_19 = arith.constant 0.000000e+00 : f32
    %21 = vector.broadcast %cst_19 : f32 to vector<8x64xf32>
    %22 = arith.maximumf %20, %21 : vector<8x64xf32>
    %c0_20 = arith.constant 0 : index
    %c0_21 = arith.constant 0 : index
    %23 = vector.load %arg9[%c0_20, %c0_21] : memref<64x64xf32, #tpu.memory_space<vmem>>, vector<64x64xf32>
    %cst_22 = arith.constant dense<0.000000e+00> : vector<8x64xf32>
    %24 = tpu.matmul %22, %23, %cst_22 {dimension_numbers = #tpu.dot_dimension_numbers<[1], [0], [0], [1], [0, 0, 1, 1], [], []>} : vector<8x64xf32>, vector<64x64xf32>, vector<8x64xf32> -> vector<8x64xf32>
    %c0_23 = arith.constant 0 : index
    %c0_24 = arith.constant 0 : index
    %25 = vector.load %arg10[%c0_23, %c0_24] : memref<1x64xf32, #tpu.memory_space<vmem>>, vector<1x64xf32>
    %26 = vector.broadcast %25 : vector<1x64xf32> to vector<8x64xf32>
    %27 = arith.addf %24, %26 : vector<8x64xf32>
    %cst_25 = arith.constant 0.000000e+00 : f32
    %28 = vector.broadcast %cst_25 : f32 to vector<8x64xf32>
    %29 = arith.maximumf %27, %28 : vector<8x64xf32>
    %c0_26 = arith.constant 0 : index
    %c0_27 = arith.constant 0 : index
    %30 = vector.load %arg11[%c0_26, %c0_27] : memref<128x128xf32, #tpu.memory_space<vmem>>, vector<64x128xf32>
    %cst_28 = arith.constant dense<0.000000e+00> : vector<8x128xf32>
    %31 = tpu.matmul %29, %30, %cst_28 {dimension_numbers = #tpu.dot_dimension_numbers<[1], [0], [0], [1], [0, 0, 1, 1], [], []>} : vector<8x64xf32>, vector<64x128xf32>, vector<8x128xf32> -> vector<8x128xf32>
    %c64 = arith.constant 64 : index
    %c0_29 = arith.constant 0 : index
    %32 = vector.load %arg11[%c64, %c0_29] : memref<128x128xf32, #tpu.memory_space<vmem>>, vector<64x128xf32>
    %cst_30 = arith.constant dense<0.000000e+00> : vector<8x128xf32>
    %33 = tpu.matmul %14, %32, %cst_30 {dimension_numbers = #tpu.dot_dimension_numbers<[1], [0], [0], [1], [0, 0, 1, 1], [], []>} : vector<8x64xf32>, vector<64x128xf32>, vector<8x128xf32> -> vector<8x128xf32>
    %34 = arith.addf %31, %33 : vector<8x128xf32>
    %c0_31 = arith.constant 0 : index
    %c0_32 = arith.constant 0 : index
    %35 = vector.load %arg12[%c0_31, %c0_32] : memref<1x128xf32, #tpu.memory_space<vmem>>, vector<1x128xf32>
    %36 = vector.broadcast %35 : vector<1x128xf32> to vector<8x128xf32>
    %37 = arith.addf %34, %36 : vector<8x128xf32>
    %38 = tpu.iota {dimensions = array<i32: 1>} : vector<8x128xi32>
    %c2_i32 = arith.constant 2 : i32
    %39 = vector.broadcast %c2_i32 : i32 to vector<8x128xi32>
    %40 = arith.cmpi slt, %38, %39 : vector<8x128xi32>
    %cst_33 = arith.constant -1.000000e+30 : f32
    %41 = vector.broadcast %cst_33 : f32 to vector<8x128xf32>
    %42 = arith.select %40, %37, %41 : vector<8x128xi1>, vector<8x128xf32>
    %cst_34 = arith.constant dense<0xFF800000> : vector<8xf32>
    %43 = vector.multi_reduction <maximumf>, %42, %cst_34 [1] : vector<8x128xf32> to vector<8xf32>
    %44 = vector.shape_cast %43 : vector<8xf32> to vector<8x1xf32>
    %45 = vector.broadcast %44 : vector<8x1xf32> to vector<8x128xf32>
    %46 = arith.subf %42, %45 : vector<8x128xf32>
    %47 = math.exp %46 : vector<8x128xf32>
    %cst_35 = arith.constant dense<0.000000e+00> : vector<8xf32>
    %48 = vector.multi_reduction <add>, %47, %cst_35 [1] : vector<8x128xf32> to vector<8xf32>
    %49 = vector.shape_cast %48 : vector<8xf32> to vector<8x1xf32>
    %50 = vector.broadcast %49 : vector<8x1xf32> to vector<8x128xf32>
    %51 = arith.divf %47, %50 : vector<8x128xf32>
    %c0_36 = arith.constant 0 : index
    %c0_37 = arith.constant 0 : index
    %52 = vector.load %arg13[%c0_36, %c0_37] : memref<8x128xf32, #tpu.memory_space<vmem>>, vector<8x128xf32>
    tpu.vector_store %arg13[%c0_36, %c0_37], %51 {strides = array<i32>} : memref<8x128xf32, #tpu.memory_space<vmem>>, vector<8x128xf32>,
    return
  }
  func.func @transform_0(%arg0: i32) -> (i32, i32) {
    %c0_i32 = arith.constant 0 : i32
    %c0_i32_0 = arith.constant 0 : i32
    return %arg0, %c0_i32 : i32, i32
  }
  func.func @transform_1(%arg0: i32) -> (i32, i32) {
    %c0_i32 = arith.constant 0 : i32
    %c0_i32_0 = arith.constant 0 : i32
    return %arg0, %c0_i32 : i32, i32
  }
  func.func @transform_2(%arg0: i32) -> (i32, i32) {
    %c0_i32 = arith.constant 0 : i32
    %c0_i32_0 = arith.constant 0 : i32
    %c0_i32_1 = arith.constant 0 : i32
    return %c0_i32, %c0_i32_0 : i32, i32
  }
  func.func @transform_3(%arg0: i32) -> (i32, i32) {
    %c0_i32 = arith.constant 0 : i32
    %c0_i32_0 = arith.constant 0 : i32
    %c0_i32_1 = arith.constant 0 : i32
    return %c0_i32, %c0_i32_0 : i32, i32
  }
  func.func @transform_4(%arg0: i32) -> (i32, i32) {
    %c0_i32 = arith.constant 0 : i32
    %c0_i32_0 = arith.constant 0 : i32
    %c0_i32_1 = arith.constant 0 : i32
    return %c0_i32, %c0_i32_0 : i32, i32
  }
  func.func @transform_5(%arg0: i32) -> (i32, i32) {
    %c0_i32 = arith.constant 0 : i32
    %c0_i32_0 = arith.constant 0 : i32
    %c0_i32_1 = arith.constant 0 : i32
    return %c0_i32, %c0_i32_0 : i32, i32
  }
  func.func @transform_6(%arg0: i32) -> (i32, i32) {
    %c0_i32 = arith.constant 0 : i32
    %c0_i32_0 = arith.constant 0 : i32
    %c0_i32_1 = arith.constant 0 : i32
    return %c0_i32, %c0_i32_0 : i32, i32
  }
  func.func @transform_7(%arg0: i32) -> (i32, i32) {
    %c0_i32 = arith.constant 0 : i32
    %c0_i32_0 = arith.constant 0 : i32
    %c0_i32_1 = arith.constant 0 : i32
    return %c0_i32, %c0_i32_0 : i32, i32
  }
  func.func @transform_8(%arg0: i32) -> (i32, i32) {
    %c0_i32 = arith.constant 0 : i32
    %c0_i32_0 = arith.constant 0 : i32
    %c0_i32_1 = arith.constant 0 : i32
    return %c0_i32, %c0_i32_0 : i32, i32
  }
  func.func @transform_9(%arg0: i32) -> (i32, i32) {
    %c0_i32 = arith.constant 0 : i32
    %c0_i32_0 = arith.constant 0 : i32
    %c0_i32_1 = arith.constant 0 : i32
    return %c0_i32, %c0_i32_0 : i32, i32
  }
  func.func @transform_10(%arg0: i32) -> (i32, i32) {
    %c0_i32 = arith.constant 0 : i32
    %c0_i32_0 = arith.constant 0 : i32
    %c0_i32_1 = arith.constant 0 : i32
    return %c0_i32, %c0_i32_0 : i32, i32
  }
  func.func @transform_11(%arg0: i32) -> (i32, i32) {
    %c0_i32 = arith.constant 0 : i32
    %c0_i32_0 = arith.constant 0 : i32
    %c0_i32_1 = arith.constant 0 : i32
    return %c0_i32, %c0_i32_0 : i32, i32
  }
  func.func @transform_12(%arg0: i32) -> (i32, i32) {
    %c0_i32 = arith.constant 0 : i32
    %c0_i32_0 = arith.constant 0 : i32
    return %arg0, %c0_i32 : i32, i32
  }
}

</mosaic_0001>

<llo_original>
// kernel: tpu_custom_call.1
$region0: #{tpu_custom_call.1}
  #allocation0 [shape = 'u32[]', space=smem, size = 0x4, offset = 0x4, fixed_abs, tag = 'smem constant byte address 0x4 - core index']
  #allocation1 [shape = 'u32[144,128]{1,0:T(1,128)}', space=vmem, size = 0x12000, scoped, tag = 'internal scratch']
  %s0 = inlined_call_operand.hbm [shape: f32[8,1664], index: 0, kind: input, shape index: {}]
  %s1 = inlined_call_operand.hbm [shape: f32[8,9], index: 1, kind: input, shape index: {}]
  %s2 = inlined_call_operand.hbm [shape: f32[1664,256], index: 2, kind: input, shape index: {}]
  %s3 = inlined_call_operand.hbm [shape: f32[1,256], index: 3, kind: input, shape index: {}]
  %s4 = inlined_call_operand.vmem [shape: f32[256,64], index: 4, kind: input, shape index: {}]
  %s5 = inlined_call_operand.hbm [shape: f32[1,64], index: 5, kind: input, shape index: {}]
  %s6 = inlined_call_operand.hbm [shape: f32[9,64], index: 6, kind: input, shape index: {}]
  %s7 = inlined_call_operand.hbm [shape: f32[1,64], index: 7, kind: input, shape index: {}]
  %s8 = inlined_call_operand.hbm [shape: f32[64,64], index: 8, kind: input, shape index: {}]
  %s9 = inlined_call_operand.hbm [shape: f32[1,64], index: 9, kind: input, shape index: {}]
  %s10 = inlined_call_operand.hbm [shape: f32[128,128], index: 10, kind: input, shape index: {}]
  %s11 = inlined_call_operand.hbm [shape: f32[1,128], index: 11, kind: input, shape index: {}]
  %s12 = inlined_call_operand.hbm [shape: f32[8,128], index: 12, kind: output, shape index: {}]
  %s13 = sld [smem:[#allocation0]]
  $region102: #{tpu_custom_call.1} parent=0
    _
  %s15 = ssub.s32 1, %s13
  %s16 = scalar_select 0, %s15, %s13
  $region1: #{tpu_custom_call.1} parent=0
    #allocation2 [shape = 'u8[53248]{0}', space=vmem, size = 0xd000, scoped, tag = 'input window, operand 0, single buffered']
    #allocation3 [shape = 's32[1]{0}', space=sflag, size = 0x4, scoped, tag = 'scoped memory for tpu_custom_call.1']
    #allocation4 [shape = 's32[1]{0}', space=sflag, size = 0x4, scoped, tag = 'scoped memory for tpu_custom_call.1']
    #allocation5 [shape = 'u8[4096]{0}', space=vmem, size = 0x1000, scoped, tag = 'input window, operand 1, single buffered']
    #allocation6 [shape = 's32[1]{0}', space=sflag, size = 0x4, scoped, tag = 'scoped memory for tpu_custom_call.1']
    #allocation7 [shape = 'u8[1703936]{0}', space=vmem, size = 0x1a0000, scoped, tag = 'input window, operand 2, single buffered']
    #allocation8 [shape = 'u8[1024]{0}', space=vmem, size = 0x400, scoped, tag = 'input window, operand 3, single buffered']
    #allocation9 [shape = 's32[1]{0}', space=sflag, size = 0x4, scoped, tag = 'scoped memory for tpu_custom_call.1']
    #allocation10 [shape = 'u8[512]{0}', space=vmem, size = 0x400, scoped, tag = 'input window, operand 5, single buffered']
    #allocation11 [shape = 'u8[8192]{0}', space=vmem, size = 0x2000, scoped, tag = 'input window, operand 6, single buffered']
    #allocation12 [shape = 's32[1]{0}', space=sflag, size = 0x4, scoped, tag = 'scoped memory for tpu_custom_call.1']
    #allocation13 [shape = 'u8[512]{0}', space=vmem, size = 0x400, scoped, tag = 'input window, operand 7, single buffered']
    #allocation14 [shape = 'u8[32768]{0}', space=vmem, size = 0x8000, scoped, tag = 'input window, operand 8, single buffered']
    #allocation15 [shape = 's32[1]{0}', space=sflag, size = 0x4, scoped, tag = 'scoped memory for tpu_custom_call.1']
    #allocation16 [shape = 'u8[512]{0}', space=vmem, size = 0x400, scoped, tag = 'input window, operand 9, single buffered']
    #allocation17 [shape = 'u8[65536]{0}', space=vmem, size = 0x10000, scoped, tag = 'input window, operand 10, single buffered']
    #allocation18 [shape = 's32[1]{0}', space=sflag, size = 0x4, scoped, tag = 'scoped memory for tpu_custom_call.1']
    #allocation19 [shape = 'u8[512]{0}', space=vmem, size = 0x400, scoped, tag = 'input window, operand 11, single buffered']
    #allocation20 [shape = 'u8[4096]{0}', space=vmem, size = 0x1000, scoped, tag = 'output window, operand 0, single buffered']
    %17 = vsyncpa [#allocation3], 0
    %18 = vsyncpa [#allocation6], 0
    %19 = vsyncpa [#allocation9], 0
    %20 = vsyncpa [#allocation12], 0
    %21 = vsyncpa [#allocation15], 0
    %22 = vsyncpa [#allocation18], 0
    %23 = vsyncpa [#allocation4], 0
    // Predicated region
    $region2: #{tpu_custom_call.1} parent=1 // pred_check
      _
    $region3: #{tpu_custom_call.1} parent=1 // pred_check_branch
      %25 = sbr.rel (0) target = $region5
    $region4: #{tpu_custom_call.1} parent=1 // pred_region
      %s27 = ssub.s32 1664, 1664
      %28 = vsyncadd [#allocation3], %s27
      %s30 = sshll.u32 [#allocation2], 4
      %s31 = int_to_ptr.vmem [resolvable:$true] %s30
      %33 = dma.hbm_to_vmem [thread:$0]  %s0, 1664, %s31, [#allocation3]
    $region5: #{tpu_custom_call.1} parent=1 // pred_fallthru
      _
    // Predicated region
    $region6: #{tpu_custom_call.1} parent=1 // pred_check
      _
    $region7: #{tpu_custom_call.1} parent=1 // pred_check_branch
      %35 = sbr.rel (0) target = $region9
    $region8: #{tpu_custom_call.1} parent=1 // pred_region
      %s37 = ssub.s32 128, 128
      %38 = vsyncadd [#allocation6], %s37
      %s40 = sshll.u32 [#allocation5], 4
      %s41 = int_to_ptr.vmem [resolvable:$true] %s40
      %43 = dma.hbm_to_vmem [thread:$0]  %s1, 128, %s41, [#allocation6]
    $region9: #{tpu_custom_call.1} parent=1 // pred_fallthru
      _
    // Predicated region
    $region10: #{tpu_custom_call.1} parent=1 // pred_check
      _
    $region11: #{tpu_custom_call.1} parent=1 // pred_check_branch
      %45 = sbr.rel (0) target = $region13
    $region12: #{tpu_custom_call.1} parent=1 // pred_region
      %s47 = ssub.s32 53248, 53248
      %48 = vsyncadd [#allocation6], %s47
      %s49 = sshll.u32 [#allocation7], 4
      %s50 = int_to_ptr.vmem [resolvable:$true] %s49
      %55 = dma.hbm_to_vmem [thread:$0]  %s2, 53248, %s50, [#allocation6], 256, 256, 16
    $region13: #{tpu_custom_call.1} parent=1 // pred_fallthru
      _
    // Predicated region
    $region14: #{tpu_custom_call.1} parent=1 // pred_check
      _
    $region15: #{tpu_custom_call.1} parent=1 // pred_check_branch
      %57 = sbr.rel (0) target = $region17
    $region16: #{tpu_custom_call.1} parent=1 // pred_region
      %s59 = ssub.s32 32, 32
      %60 = vsyncadd [#allocation9], %s59
      %s62 = sshll.u32 [#allocation8], 4
      %s63 = int_to_ptr.vmem [resolvable:$true] %s62
      %65 = dma.hbm_to_vmem [thread:$0]  %s3, 32, %s63, [#allocation9]
    $region17: #{tpu_custom_call.1} parent=1 // pred_fallthru
      _
    // Predicated region
    $region18: #{tpu_custom_call.1} parent=1 // pred_check
      _
    $region19: #{tpu_custom_call.1} parent=1 // pred_check_branch
      %67 = sbr.rel (0) target = $region21
    $region20: #{tpu_custom_call.1} parent=1 // pred_region
      _
    $region21: #{tpu_custom_call.1} parent=1 // pred_fallthru
      _
    // Predicated region
    $region22: #{tpu_custom_call.1} parent=1 // pred_check
      _
    $region23: #{tpu_custom_call.1} parent=1 // pred_check_branch
      %69 = sbr.rel (0) target = $region25
    $region24: #{tpu_custom_call.1} parent=1 // pred_region
      %s71 = ssub.s32 16, 16
      %72 = vsyncadd [#allocation9], %s71
      %s74 = sshll.u32 [#allocation10], 4
      %s75 = int_to_ptr.vmem [resolvable:$true] %s74
      %77 = dma.hbm_to_vmem [thread:$0]  %s5, 16, %s75, [#allocation9]
    $region25: #{tpu_custom_call.1} parent=1 // pred_fallthru
      _
    // Predicated region
    $region26: #{tpu_custom_call.1} parent=1 // pred_check
      _
    $region27: #{tpu_custom_call.1} parent=1 // pred_check_branch
      %79 = sbr.rel (0) target = $region29
    $region28: #{tpu_custom_call.1} parent=1 // pred_region
      %s81 = ssub.s32 256, 256
      %82 = vsyncadd [#allocation12], %s81
      %s83 = sshll.u32 [#allocation11], 4
      %s84 = int_to_ptr.vmem [resolvable:$true] %s83
      %89 = dma.hbm_to_vmem [thread:$0]  %s6, 256, %s84, [#allocation12], 128, 128, 8
    $region29: #{tpu_custom_call.1} parent=1 // pred_fallthru
      _
    // Predicated region
    $region30: #{tpu_custom_call.1} parent=1 // pred_check
      _
    $region31: #{tpu_custom_call.1} parent=1 // pred_check_branch
      %91 = sbr.rel (0) target = $region33
    $region32: #{tpu_custom_call.1} parent=1 // pred_region
      %s93 = ssub.s32 16, 16
      %94 = vsyncadd [#allocation12], %s93
      %s96 = sshll.u32 [#allocation13], 4
      %s97 = int_to_ptr.vmem [resolvable:$true] %s96
      %99 = dma.hbm_to_vmem [thread:$0]  %s7, 16, %s97, [#allocation12]
    $region33: #{tpu_custom_call.1} parent=1 // pred_fallthru
      _
    // Predicated region
    $region34: #{tpu_custom_call.1} parent=1 // pred_check
      _
    $region35: #{tpu_custom_call.1} parent=1 // pred_check_branch
      %101 = sbr.rel (0) target = $region37
    $region36: #{tpu_custom_call.1} parent=1 // pred_region
      %s103 = ssub.s32 1024, 1024
      %104 = vsyncadd [#allocation15], %s103
      %s105 = sshll.u32 [#allocation14], 4
      %s106 = int_to_ptr.vmem [resolvable:$true] %s105
      %111 = dma.hbm_to_vmem [thread:$0]  %s8, 1024, %s106, [#allocation15], 128, 128, 8
    $region37: #{tpu_custom_call.1} parent=1 // pred_fallthru
      _
    // Predicated region
    $region38: #{tpu_custom_call.1} parent=1 // pred_check
      _
    $region39: #{tpu_custom_call.1} parent=1 // pred_check_branch
      %113 = sbr.rel (0) target = $region41
    $region40: #{tpu_custom_call.1} parent=1 // pred_region
      %s115 = ssub.s32 16, 16
      %116 = vsyncadd [#allocation15], %s115
      %s118 = sshll.u32 [#allocation16], 4
      %s119 = int_to_ptr.vmem [resolvable:$true] %s118
      %121 = dma.hbm_to_vmem [thread:$0]  %s9, 16, %s119, [#allocation15]
    $region41: #{tpu_custom_call.1} parent=1 // pred_fallthru
      _
    // Predicated region
    $region42: #{tpu_custom_call.1} parent=1 // pred_check
      _
    $region43: #{tpu_custom_call.1} parent=1 // pred_check_branch
      %123 = sbr.rel (0) target = $region45
    $region44: #{tpu_custom_call.1} parent=1 // pred_region
      %s125 = ssub.s32 2048, 2048
      %126 = vsyncadd [#allocation18], %s125
      %s127 = sshll.u32 [#allocation17], 4
      %s128 = int_to_ptr.vmem [resolvable:$true] %s127
      %133 = dma.hbm_to_vmem [thread:$0]  %s10, 2048, %s128, [#allocation18], 128, 128, 8
    $region45: #{tpu_custom_call.1} parent=1 // pred_fallthru
      _
    // Predicated region
    $region46: #{tpu_custom_call.1} parent=1 // pred_check
      _
    $region47: #{tpu_custom_call.1} parent=1 // pred_check_branch
      %135 = sbr.rel (0) target = $region49
    $region48: #{tpu_custom_call.1} parent=1 // pred_region
      %s137 = ssub.s32 16, 16
      %138 = vsyncadd [#allocation18], %s137
      %s140 = sshll.u32 [#allocation19], 4
      %s141 = int_to_ptr.vmem [resolvable:$true] %s140
      %143 = dma.hbm_to_vmem [thread:$0]  %s11, 16, %s141, [#allocation18]
    $region49: #{tpu_custom_call.1} parent=1 // pred_fallthru
      _
    // Predicated region
    $region50: #{tpu_custom_call.1} parent=1 // pred_check
      _
    $region51: #{tpu_custom_call.1} parent=1 // pred_check_branch
      %145 = sbr.rel (0) target = $region53
    $region52: #{tpu_custom_call.1} parent=1 // pred_region
      %146 = dma.done [#allocation3], 1664
    $region53: #{tpu_custom_call.1} parent=1 // pred_fallthru
      _
    // Predicated region
    $region54: #{tpu_custom_call.1} parent=1 // pred_check
      _
    $region55: #{tpu_custom_call.1} parent=1 // pred_check_branch
      %148 = sbr.rel (0) target = $region57
    $region56: #{tpu_custom_call.1} parent=1 // pred_region
      %149 = dma.done [#allocation6], 128
    $region57: #{tpu_custom_call.1} parent=1 // pred_fallthru
      _
    // Predicated region
    $region58: #{tpu_custom_call.1} parent=1 // pred_check
      _
    $region59: #{tpu_custom_call.1} parent=1 // pred_check_branch
      %151 = sbr.rel (0) target = $region61
    $region60: #{tpu_custom_call.1} parent=1 // pred_region
      %152 = dma.done [#allocation6], 53248
    $region61: #{tpu_custom_call.1} parent=1 // pred_fallthru
      _
    // Predicated region
    $region62: #{tpu_custom_call.1} parent=1 // pred_check
      _
    $region63: #{tpu_custom_call.1} parent=1 // pred_check_branch
      %154 = sbr.rel (0) target = $region65
    $region64: #{tpu_custom_call.1} parent=1 // pred_region
      %155 = dma.done [#allocation9], 32
    $region65: #{tpu_custom_call.1} parent=1 // pred_fallthru
      _
    // Predicated region
    $region66: #{tpu_custom_call.1} parent=1 // pred_check
      _
    $region67: #{tpu_custom_call.1} parent=1 // pred_check_branch
      %157 = sbr.rel (0) target = $region69
    $region68: #{tpu_custom_call.1} parent=1 // pred_region
      %158 = dma.done [#allocation9], 16
    $region69: #{tpu_custom_call.1} parent=1 // pred_fallthru
      _
    // Predicated region
    $region70: #{tpu_custom_call.1} parent=1 // pred_check
      _
    $region71: #{tpu_custom_call.1} parent=1 // pred_check_branch
      %160 = sbr.rel (0) target = $region73
    $region72: #{tpu_custom_call.1} parent=1 // pred_region
      %161 = dma.done [#allocation12], 256
    $region73: #{tpu_custom_call.1} parent=1 // pred_fallthru
      _
    // Predicated region
    $region74: #{tpu_custom_call.1} parent=1 // pred_check
      _
    $region75: #{tpu_custom_call.1} parent=1 // pred_check_branch
      %163 = sbr.rel (0) target = $region77
    $region76: #{tpu_custom_call.1} parent=1 // pred_region
      %164 = dma.done [#allocation12], 16
    $region77: #{tpu_custom_call.1} parent=1 // pred_fallthru
      _
    // Predicated region
    $region78: #{tpu_custom_call.1} parent=1 // pred_check
      _
    $region79: #{tpu_custom_call.1} parent=1 // pred_check_branch
      %166 = sbr.rel (0) target = $region81
    $region80: #{tpu_custom_call.1} parent=1 // pred_region
      %167 = dma.done [#allocation15], 1024
    $region81: #{tpu_custom_call.1} parent=1 // pred_fallthru
      _
    // Predicated region
    $region82: #{tpu_custom_call.1} parent=1 // pred_check
      _
    $region83: #{tpu_custom_call.1} parent=1 // pred_check_branch
      %169 = sbr.rel (0) target = $region85
    $region84: #{tpu_custom_call.1} parent=1 // pred_region
      %170 = dma.done [#allocation15], 16
    $region85: #{tpu_custom_call.1} parent=1 // pred_fallthru
      _
    // Predicated region
    $region86: #{tpu_custom_call.1} parent=1 // pred_check
      _
    $region87: #{tpu_custom_call.1} parent=1 // pred_check_branch
      %172 = sbr.rel (0) target = $region89
    $region88: #{tpu_custom_call.1} parent=1 // pred_region
      %173 = dma.done [#allocation18], 2048
    $region89: #{tpu_custom_call.1} parent=1 // pred_fallthru
      _
    // Predicated region
    $region90: #{tpu_custom_call.1} parent=1 // pred_check
      _
    $region91: #{tpu_custom_call.1} parent=1 // pred_check_branch
      %175 = sbr.rel (0) target = $region93
    $region92: #{tpu_custom_call.1} parent=1 // pred_region
      %176 = dma.done [#allocation18], 16
    $region93: #{tpu_custom_call.1} parent=1 // pred_fallthru
      _
    %v177 = vld [vmem:[#allocation2] sm:$0xff]
    %v178 = vld [vmem:[#allocation2 + $0x8] sm:$0xff]
    %v179 = vld [vmem:[#allocation2 + $0x10] sm:$0xff]
    %v180 = vld [vmem:[#allocation2 + $0x18] sm:$0xff]
    %v181 = vld [vmem:[#allocation2 + $0x20] sm:$0xff]
    %v182 = vld [vmem:[#allocation2 + $0x28] sm:$0xff]
    %v183 = vld [vmem:[#allocation2 + $0x30] sm:$0xff]
    %v184 = vld [vmem:[#allocation2 + $0x38] sm:$0xff]
    %v185 = vld [vmem:[#allocation2 + $0x40] sm:$0xff]
    %v186 = vld [vmem:[#allocation2 + $0x48] sm:$0xff]
    %v187 = vld [vmem:[#allocation2 + $0x50] sm:$0xff]
    %v188 = vld [vmem:[#allocation2 + $0x58] sm:$0xff]
    %v189 = vld [vmem:[#allocation2 + $0x60] sm:$0xff]
    %v190 = vld [vmem:[#allocation7] sm:$0xff]
    %v191 = vld [vmem:[#allocation7 + $0x8] sm:$0xff]
    %v192 = vld [vmem:[#allocation7 + $0x10] sm:$0xff]
    %v193 = vld [vmem:[#allocation7 + $0x18] sm:$0xff]
    %v194 = vld [vmem:[#allocation7 + $0x20] sm:$0xff]
    %v195 = vld [vmem:[#allocation7 + $0x28] sm:$0xff]
    %v196 = vld [vmem:[#allocation7 + $0x30] sm:$0xff]
    %v197 = vld [vmem:[#allocation7 + $0x38] sm:$0xff]
    %v198 = vld [vmem:[#allocation7 + $0x40] sm:$0xff]
    %v199 = vld [vmem:[#allocation7 + $0x48] sm:$0xff]
    %v200 = vld [vmem:[#allocation7 + $0x50] sm:$0xff]
    %v201 = vld [vmem:[#allocation7 + $0x58] sm:$0xff]
    %v202 = vld [vmem:[#allocation7 + $0x60] sm:$0xff]
    %v203 = vld [vmem:[#allocation7 + $0x68] sm:$0xff]
    %v204 = vld [vmem:[#allocation7 + $0x70] sm:$0xff]
    %v205 = vld [vmem:[#allocation7 + $0x78] sm:$0xff]
    %v206 = vld [vmem:[#allocation7 + $0x80] sm:$0xff]
    %v207 = vld [vmem:[#allocation7 + $0x88] sm:$0xff]
    %v208 = vld [vmem:[#allocation7 + $0x90] sm:$0xff]
    %v209 = vld [vmem:[#allocation7 + $0x98] sm:$0xff]
    %v210 = vld [vmem:[#allocation7 + $0xa0] sm:$0xff]
    %v211 = vld [vmem:[#allocation7 + $0xa8] sm:$0xff]
    %v212 = vld [vmem:[#allocation7 + $0xb0] sm:$0xff]
    %v213 = vld [vmem:[#allocation7 + $0xb8] sm:$0xff]
    %v214 = vld [vmem:[#allocation7 + $0xc0] sm:$0xff]
    %v215 = vld [vmem:[#allocation7 + $0xc8] sm:$0xff]
    %v216 = vld [vmem:[#allocation7 + $0xd0] sm:$0xff]
    %v217 = vld [vmem:[#allocation7 + $0xd8] sm:$0xff]
    %v218 = vld [vmem:[#allocation7 + $0xe0] sm:$0xff]
    %v219 = vld [vmem:[#allocation7 + $0xe8] sm:$0xff]
    %v220 = vld [vmem:[#allocation7 + $0xf0] sm:$0xff]
    %v221 = vld [vmem:[#allocation7 + $0xf8] sm:$0xff]
    %v222 = vld [vmem:[#allocation7 + $0x100] sm:$0xff]
    %v223 = vld [vmem:[#allocation7 + $0x108] sm:$0xff]
    %v224 = vld [vmem:[#allocation7 + $0x110] sm:$0xff]
    %v225 = vld [vmem:[#allocation7 + $0x118] sm:$0xff]
    %v226 = vld [vmem:[#allocation7 + $0x120] sm:$0xff]
    %v227 = vld [vmem:[#allocation7 + $0x128] sm:$0xff]
    %v228 = vld [vmem:[#allocation7 + $0x130] sm:$0xff]
    %v229 = vld [vmem:[#allocation7 + $0x138] sm:$0xff]
    %v230 = vld [vmem:[#allocation7 + $0x140] sm:$0xff]
    %v231 = vld [vmem:[#allocation7 + $0x148] sm:$0xff]
    %v232 = vld [vmem:[#allocation7 + $0x150] sm:$0xff]
    %v233 = vld [vmem:[#allocation7 + $0x158] sm:$0xff]
    %v234 = vld [vmem:[#allocation7 + $0x160] sm:$0xff]
    %v235 = vld [vmem:[#allocation7 + $0x168] sm:$0xff]
    %v236 = vld [vmem:[#allocation7 + $0x170] sm:$0xff]
    %v237 = vld [vmem:[#allocation7 + $0x178] sm:$0xff]
    %v238 = vld [vmem:[#allocation7 + $0x180] sm:$0xff]
    %v239 = vld [vmem:[#allocation7 + $0x188] sm:$0xff]
    %v240 = vld [vmem:[#allocation7 + $0x190] sm:$0xff]
    %v241 = vld [vmem:[#allocation7 + $0x198] sm:$0xff]
    %v242 = vld [vmem:[#allocation7 + $0x1a0] sm:$0xff]
    %v243 = vld [vmem:[#allocation7 + $0x1a8] sm:$0xff]
    %v244 = vld [vmem:[#allocation7 + $0x1b0] sm:$0xff]
    %v245 = vld [vmem:[#allocation7 + $0x1b8] sm:$0xff]
    %v246 = vld [vmem:[#allocation7 + $0x1c0] sm:$0xff]
    %v247 = vld [vmem:[#allocation7 + $0x1c8] sm:$0xff]
    %v248 = vld [vmem:[#allocation7 + $0x1d0] sm:$0xff]
    %v249 = vld [vmem:[#allocation7 + $0x1d8] sm:$0xff]
    %v250 = vld [vmem:[#allocation7 + $0x1e0] sm:$0xff]
    %v251 = vld [vmem:[#allocation7 + $0x1e8] sm:$0xff]
    %v252 = vld [vmem:[#allocation7 + $0x1f0] sm:$0xff]
    %v253 = vld [vmem:[#allocation7 + $0x1f8] sm:$0xff]
    %v254 = vld [vmem:[#allocation7 + $0x200] sm:$0xff]
    %v255 = vld [vmem:[#allocation7 + $0x208] sm:$0xff]
    %v256 = vld [vmem:[#allocation7 + $0x210] sm:$0xff]
    %v257 = vld [vmem:[#allocation7 + $0x218] sm:$0xff]
    %v258 = vld [vmem:[#allocation7 + $0x220] sm:$0xff]
    %v259 = vld [vmem:[#allocation7 + $0x228] sm:$0xff]
    %v260 = vld [vmem:[#allocation7 + $0x230] sm:$0xff]
    %v261 = vld [vmem:[#allocation7 + $0x238] sm:$0xff]
    %v262 = vld [vmem:[#allocation7 + $0x240] sm:$0xff]
    %v263 = vld [vmem:[#allocation7 + $0x248] sm:$0xff]
    %v264 = vld [vmem:[#allocation7 + $0x250] sm:$0xff]
    %v265 = vld [vmem:[#allocation7 + $0x258] sm:$0xff]
    %v266 = vld [vmem:[#allocation7 + $0x260] sm:$0xff]
    %v267 = vld [vmem:[#allocation7 + $0x268] sm:$0xff]
    %v268 = vld [vmem:[#allocation7 + $0x270] sm:$0xff]
    %v269 = vld [vmem:[#allocation7 + $0x278] sm:$0xff]
    %v270 = vld [vmem:[#allocation7 + $0x280] sm:$0xff]
    %v271 = vld [vmem:[#allocation7 + $0x288] sm:$0xff]
    %v272 = vld [vmem:[#allocation7 + $0x290] sm:$0xff]
    %v273 = vld [vmem:[#allocation7 + $0x298] sm:$0xff]
    %v274 = vld [vmem:[#allocation7 + $0x2a0] sm:$0xff]
    %v275 = vld [vmem:[#allocation7 + $0x2a8] sm:$0xff]
    %v276 = vld [vmem:[#allocation7 + $0x2b0] sm:$0xff]
    %v277 = vld [vmem:[#allocation7 + $0x2b8] sm:$0xff]
    %v278 = vld [vmem:[#allocation7 + $0x2c0] sm:$0xff]
    %v279 = vld [vmem:[#allocation7 + $0x2c8] sm:$0xff]
    %v280 = vld [vmem:[#allocation7 + $0x2d0] sm:$0xff]
    %v281 = vld [vmem:[#allocation7 + $0x2d8] sm:$0xff]
    %v282 = vld [vmem:[#allocation7 + $0x2e0] sm:$0xff]
    %v283 = vld [vmem:[#allocation7 + $0x2e8] sm:$0xff]
    %v284 = vld [vmem:[#allocation7 + $0x2f0] sm:$0xff]
    %v285 = vld [vmem:[#allocation7 + $0x2f8] sm:$0xff]
    %v286 = vld [vmem:[#allocation7 + $0x300] sm:$0xff]
    %v287 = vld [vmem:[#allocation7 + $0x308] sm:$0xff]
    %v288 = vld [vmem:[#allocation7 + $0x310] sm:$0xff]
    %v289 = vld [vmem:[#allocation7 + $0x318] sm:$0xff]
    %v290 = vld [vmem:[#allocation7 + $0x320] sm:$0xff]
    %v291 = vld [vmem:[#allocation7 + $0x328] sm:$0xff]
    %v292 = vld [vmem:[#allocation7 + $0x330] sm:$0xff]
    %v293 = vld [vmem:[#allocation7 + $0x338] sm:$0xff]
    %v294 = vld [vmem:[#allocation7 + $0x340] sm:$0xff]
    %v295 = vld [vmem:[#allocation7 + $0x348] sm:$0xff]
    %v296 = vld [vmem:[#allocation7 + $0x350] sm:$0xff]
    %v297 = vld [vmem:[#allocation7 + $0x358] sm:$0xff]
    %v298 = vld [vmem:[#allocation7 + $0x360] sm:$0xff]
    %v299 = vld [vmem:[#allocation7 + $0x368] sm:$0xff]
    %v300 = vld [vmem:[#allocation7 + $0x370] sm:$0xff]
    %v301 = vld [vmem:[#allocation7 + $0x378] sm:$0xff]
    %v302 = vld [vmem:[#allocation7 + $0x380] sm:$0xff]
    %v303 = vld [vmem:[#allocation7 + $0x388] sm:$0xff]
    %v304 = vld [vmem:[#allocation7 + $0x390] sm:$0xff]
    %v305 = vld [vmem:[#allocation7 + $0x398] sm:$0xff]
    %v306 = vld [vmem:[#allocation7 + $0x3a0] sm:$0xff]
    %v307 = vld [vmem:[#allocation7 + $0x3a8] sm:$0xff]
    %v308 = vld [vmem:[#allocation7 + $0x3b0] sm:$0xff]
    %v309 = vld [vmem:[#allocation7 + $0x3b8] sm:$0xff]
    %v310 = vld [vmem:[#allocation7 + $0x3c0] sm:$0xff]
    %v311 = vld [vmem:[#allocation7 + $0x3c8] sm:$0xff]
    %v312 = vld [vmem:[#allocation7 + $0x3d0] sm:$0xff]
    %v313 = vld [vmem:[#allocation7 + $0x3d8] sm:$0xff]
    %v314 = vld [vmem:[#allocation7 + $0x3e0] sm:$0xff]
    %v315 = vld [vmem:[#allocation7 + $0x3e8] sm:$0xff]
    %v316 = vld [vmem:[#allocation7 + $0x3f0] sm:$0xff]
    %v317 = vld [vmem:[#allocation7 + $0x3f8] sm:$0xff]
    %v318 = vld [vmem:[#allocation7 + $0x400] sm:$0xff]
    %v319 = vld [vmem:[#allocation7 + $0x408] sm:$0xff]
    %v320 = vld [vmem:[#allocation7 + $0x410] sm:$0xff]
    %v321 = vld [vmem:[#allocation7 + $0x418] sm:$0xff]
    %v322 = vld [vmem:[#allocation7 + $0x420] sm:$0xff]
    %v323 = vld [vmem:[#allocation7 + $0x428] sm:$0xff]
    %v324 = vld [vmem:[#allocation7 + $0x430] sm:$0xff]
    %v325 = vld [vmem:[#allocation7 + $0x438] sm:$0xff]
    %v326 = vld [vmem:[#allocation7 + $0x440] sm:$0xff]
    %v327 = vld [vmem:[#allocation7 + $0x448] sm:$0xff]
    %v328 = vld [vmem:[#allocation7 + $0x450] sm:$0xff]
    %v329 = vld [vmem:[#allocation7 + $0x458] sm:$0xff]
    %v330 = vld [vmem:[#allocation7 + $0x460] sm:$0xff]
    %v331 = vld [vmem:[#allocation7 + $0x468] sm:$0xff]
    %v332 = vld [vmem:[#allocation7 + $0x470] sm:$0xff]
    %v333 = vld [vmem:[#allocation7 + $0x478] sm:$0xff]
    %v334 = vld [vmem:[#allocation7 + $0x480] sm:$0xff]
    %v335 = vld [vmem:[#allocation7 + $0x488] sm:$0xff]
    %v336 = vld [vmem:[#allocation7 + $0x490] sm:$0xff]
    %v337 = vld [vmem:[#allocation7 + $0x498] sm:$0xff]
    %v338 = vld [vmem:[#allocation7 + $0x4a0] sm:$0xff]
    %v339 = vld [vmem:[#allocation7 + $0x4a8] sm:$0xff]
    %v340 = vld [vmem:[#allocation7 + $0x4b0] sm:$0xff]
    %v341 = vld [vmem:[#allocation7 + $0x4b8] sm:$0xff]
    %v342 = vld [vmem:[#allocation7 + $0x4c0] sm:$0xff]
    %v343 = vld [vmem:[#allocation7 + $0x4c8] sm:$0xff]
    %v344 = vld [vmem:[#allocation7 + $0x4d0] sm:$0xff]
    %v345 = vld [vmem:[#allocation7 + $0x4d8] sm:$0xff]
    %v346 = vld [vmem:[#allocation7 + $0x4e0] sm:$0xff]
    %v347 = vld [vmem:[#allocation7 + $0x4e8] sm:$0xff]
    %v348 = vld [vmem:[#allocation7 + $0x4f0] sm:$0xff]
    %v349 = vld [vmem:[#allocation7 + $0x4f8] sm:$0xff]
    %v350 = vld [vmem:[#allocation7 + $0x500] sm:$0xff]
    %v351 = vld [vmem:[#allocation7 + $0x508] sm:$0xff]
    %v352 = vld [vmem:[#allocation7 + $0x510] sm:$0xff]
    %v353 = vld [vmem:[#allocation7 + $0x518] sm:$0xff]
    %v354 = vld [vmem:[#allocation7 + $0x520] sm:$0xff]
    %v355 = vld [vmem:[#allocation7 + $0x528] sm:$0xff]
    %v356 = vld [vmem:[#allocation7 + $0x530] sm:$0xff]
    %v357 = vld [vmem:[#allocation7 + $0x538] sm:$0xff]
    %v358 = vld [vmem:[#allocation7 + $0x540] sm:$0xff]
    %v359 = vld [vmem:[#allocation7 + $0x548] sm:$0xff]
    %v360 = vld [vmem:[#allocation7 + $0x550] sm:$0xff]
    %v361 = vld [vmem:[#allocation7 + $0x558] sm:$0xff]
    %v362 = vld [vmem:[#allocation7 + $0x560] sm:$0xff]
    %v363 = vld [vmem:[#allocation7 + $0x568] sm:$0xff]
    %v364 = vld [vmem:[#allocation7 + $0x570] sm:$0xff]
    %v365 = vld [vmem:[#allocation7 + $0x578] sm:$0xff]
    %v366 = vld [vmem:[#allocation7 + $0x580] sm:$0xff]
    %v367 = vld [vmem:[#allocation7 + $0x588] sm:$0xff]
    %v368 = vld [vmem:[#allocation7 + $0x590] sm:$0xff]
    %v369 = vld [vmem:[#allocation7 + $0x598] sm:$0xff]
    %v370 = vld [vmem:[#allocation7 + $0x5a0] sm:$0xff]
    %v371 = vld [vmem:[#allocation7 + $0x5a8] sm:$0xff]
    %v372 = vld [vmem:[#allocation7 + $0x5b0] sm:$0xff]
    %v373 = vld [vmem:[#allocation7 + $0x5b8] sm:$0xff]
    %v374 = vld [vmem:[#allocation7 + $0x5c0] sm:$0xff]
    %v375 = vld [vmem:[#allocation7 + $0x5c8] sm:$0xff]
    %v376 = vld [vmem:[#allocation7 + $0x5d0] sm:$0xff]
    %v377 = vld [vmem:[#allocation7 + $0x5d8] sm:$0xff]
    %v378 = vld [vmem:[#allocation7 + $0x5e0] sm:$0xff]
    %v379 = vld [vmem:[#allocation7 + $0x5e8] sm:$0xff]
    %v380 = vld [vmem:[#allocation7 + $0x5f0] sm:$0xff]
    %v381 = vld [vmem:[#allocation7 + $0x5f8] sm:$0xff]
    %v382 = vld [vmem:[#allocation7 + $0x600] sm:$0xff]
    %v383 = vld [vmem:[#allocation7 + $0x608] sm:$0xff]
    %v384 = vld [vmem:[#allocation7 + $0x610] sm:$0xff]
    %v385 = vld [vmem:[#allocation7 + $0x618] sm:$0xff]
    %v386 = vld [vmem:[#allocation7 + $0x620] sm:$0xff]
    %v387 = vld [vmem:[#allocation7 + $0x628] sm:$0xff]
    %v388 = vld [vmem:[#allocation7 + $0x630] sm:$0xff]
    %v389 = vld [vmem:[#allocation7 + $0x638] sm:$0xff]
    %v390 = vld [vmem:[#allocation7 + $0x640] sm:$0xff]
    %v391 = vld [vmem:[#allocation7 + $0x648] sm:$0xff]
    %v392 = vld [vmem:[#allocation7 + $0x650] sm:$0xff]
    %v393 = vld [vmem:[#allocation7 + $0x658] sm:$0xff]
    %v394 = vld [vmem:[#allocation7 + $0x660] sm:$0xff]
    %v395 = vld [vmem:[#allocation7 + $0x668] sm:$0xff]
    %v396 = vld [vmem:[#allocation7 + $0x670] sm:$0xff]
    %v397 = vld [vmem:[#allocation7 + $0x678] sm:$0xff]
    %v398 = vld [vmem:[#allocation7 + $0x680] sm:$0xff]
    %v399 = vld [vmem:[#allocation7 + $0x688] sm:$0xff]
    %v400 = vld [vmem:[#allocation7 + $0x690] sm:$0xff]
    %v401 = vld [vmem:[#allocation7 + $0x698] sm:$0xff]
    %v402 = vld [vmem:[#allocation7 + $0x6a0] sm:$0xff]
    %v403 = vld [vmem:[#allocation7 + $0x6a8] sm:$0xff]
    %v404 = vld [vmem:[#allocation7 + $0x6b0] sm:$0xff]
    %v405 = vld [vmem:[#allocation7 + $0x6b8] sm:$0xff]
    %v406 = vld [vmem:[#allocation7 + $0x6c0] sm:$0xff]
    %v407 = vld [vmem:[#allocation7 + $0x6c8] sm:$0xff]
    %v408 = vld [vmem:[#allocation7 + $0x6d0] sm:$0xff]
    %v409 = vld [vmem:[#allocation7 + $0x6d8] sm:$0xff]
    %v410 = vld [vmem:[#allocation7 + $0x6e0] sm:$0xff]
    %v411 = vld [vmem:[#allocation7 + $0x6e8] sm:$0xff]
    %v412 = vld [vmem:[#allocation7 + $0x6f0] sm:$0xff]
    %v413 = vld [vmem:[#allocation7 + $0x6f8] sm:$0xff]
    %v414 = vld [vmem:[#allocation7 + $0x700] sm:$0xff]
    %v415 = vld [vmem:[#allocation7 + $0x708] sm:$0xff]
    %v416 = vld [vmem:[#allocation7 + $0x710] sm:$0xff]
    %v417 = vld [vmem:[#allocation7 + $0x718] sm:$0xff]
    %v418 = vld [vmem:[#allocation7 + $0x720] sm:$0xff]
    %v419 = vld [vmem:[#allocation7 + $0x728] sm:$0xff]
    %v420 = vld [vmem:[#allocation7 + $0x730] sm:$0xff]
    %v421 = vld [vmem:[#allocation7 + $0x738] sm:$0xff]
    %v422 = vld [vmem:[#allocation7 + $0x740] sm:$0xff]
    %v423 = vld [vmem:[#allocation7 + $0x748] sm:$0xff]
    %v424 = vld [vmem:[#allocation7 + $0x750] sm:$0xff]
    %v425 = vld [vmem:[#allocation7 + $0x758] sm:$0xff]
    %v426 = vld [vmem:[#allocation7 + $0x760] sm:$0xff]
    %v427 = vld [vmem:[#allocation7 + $0x768] sm:$0xff]
    %v428 = vld [vmem:[#allocation7 + $0x770] sm:$0xff]
    %v429 = vld [vmem:[#allocation7 + $0x778] sm:$0xff]
    %v430 = vld [vmem:[#allocation7 + $0x780] sm:$0xff]
    %v431 = vld [vmem:[#allocation7 + $0x788] sm:$0xff]
    %v432 = vld [vmem:[#allocation7 + $0x790] sm:$0xff]
    %v433 = vld [vmem:[#allocation7 + $0x798] sm:$0xff]
    %v434 = vld [vmem:[#allocation7 + $0x7a0] sm:$0xff]
    %v435 = vld [vmem:[#allocation7 + $0x7a8] sm:$0xff]
    %v436 = vld [vmem:[#allocation7 + $0x7b0] sm:$0xff]
    %v437 = vld [vmem:[#allocation7 + $0x7b8] sm:$0xff]
    %v438 = vld [vmem:[#allocation7 + $0x7c0] sm:$0xff]
    %v439 = vld [vmem:[#allocation7 + $0x7c8] sm:$0xff]
    %v440 = vld [vmem:[#allocation7 + $0x7d0] sm:$0xff]
    %v441 = vld [vmem:[#allocation7 + $0x7d8] sm:$0xff]
    %v442 = vld [vmem:[#allocation7 + $0x7e0] sm:$0xff]
    %v443 = vld [vmem:[#allocation7 + $0x7e8] sm:$0xff]
    %v444 = vld [vmem:[#allocation7 + $0x7f0] sm:$0xff]
    %v445 = vld [vmem:[#allocation7 + $0x7f8] sm:$0xff]
    %v446 = vld [vmem:[#allocation7 + $0x800] sm:$0xff]
    %v447 = vld [vmem:[#allocation7 + $0x808] sm:$0xff]
    %v448 = vld [vmem:[#allocation7 + $0x810] sm:$0xff]
    %v449 = vld [vmem:[#allocation7 + $0x818] sm:$0xff]
    %v450 = vld [vmem:[#allocation7 + $0x820] sm:$0xff]
    %v451 = vld [vmem:[#allocation7 + $0x828] sm:$0xff]
    %v452 = vld [vmem:[#allocation7 + $0x830] sm:$0xff]
    %v453 = vld [vmem:[#allocation7 + $0x838] sm:$0xff]
    %v454 = vld [vmem:[#allocation7 + $0x840] sm:$0xff]
    %v455 = vld [vmem:[#allocation7 + $0x848] sm:$0xff]
    %v456 = vld [vmem:[#allocation7 + $0x850] sm:$0xff]
    %v457 = vld [vmem:[#allocation7 + $0x858] sm:$0xff]
    %v458 = vld [vmem:[#allocation7 + $0x860] sm:$0xff]
    %v459 = vld [vmem:[#allocation7 + $0x868] sm:$0xff]
    %v460 = vld [vmem:[#allocation7 + $0x870] sm:$0xff]
    %v461 = vld [vmem:[#allocation7 + $0x878] sm:$0xff]
    %v462 = vld [vmem:[#allocation7 + $0x880] sm:$0xff]
    %v463 = vld [vmem:[#allocation7 + $0x888] sm:$0xff]
    %v464 = vld [vmem:[#allocation7 + $0x890] sm:$0xff]
    %v465 = vld [vmem:[#allocation7 + $0x898] sm:$0xff]
    %v466 = vld [vmem:[#allocation7 + $0x8a0] sm:$0xff]
    %v467 = vld [vmem:[#allocation7 + $0x8a8] sm:$0xff]
    %v468 = vld [vmem:[#allocation7 + $0x8b0] sm:$0xff]
    %v469 = vld [vmem:[#allocation7 + $0x8b8] sm:$0xff]
    %v470 = vld [vmem:[#allocation7 + $0x8c0] sm:$0xff]
    %v471 = vld [vmem:[#allocation7 + $0x8c8] sm:$0xff]
    %v472 = vld [vmem:[#allocation7 + $0x8d0] sm:$0xff]
    %v473 = vld [vmem:[#allocation7 + $0x8d8] sm:$0xff]
    %v474 = vld [vmem:[#allocation7 + $0x8e0] sm:$0xff]
    %v475 = vld [vmem:[#allocation7 + $0x8e8] sm:$0xff]
    %v476 = vld [vmem:[#allocation7 + $0x8f0] sm:$0xff]
    %v477 = vld [vmem:[#allocation7 + $0x8f8] sm:$0xff]
    %v478 = vld [vmem:[#allocation7 + $0x900] sm:$0xff]
    %v479 = vld [vmem:[#allocation7 + $0x908] sm:$0xff]
    %v480 = vld [vmem:[#allocation7 + $0x910] sm:$0xff]
    %v481 = vld [vmem:[#allocation7 + $0x918] sm:$0xff]
    %v482 = vld [vmem:[#allocation7 + $0x920] sm:$0xff]
    %v483 = vld [vmem:[#allocation7 + $0x928] sm:$0xff]
    %v484 = vld [vmem:[#allocation7 + $0x930] sm:$0xff]
    %v485 = vld [vmem:[#allocation7 + $0x938] sm:$0xff]
    %v486 = vld [vmem:[#allocation7 + $0x940] sm:$0xff]
    %v487 = vld [vmem:[#allocation7 + $0x948] sm:$0xff]
    %v488 = vld [vmem:[#allocation7 + $0x950] sm:$0xff]
    %v489 = vld [vmem:[#allocation7 + $0x958] sm:$0xff]
    %v490 = vld [vmem:[#allocation7 + $0x960] sm:$0xff]
    %v491 = vld [vmem:[#allocation7 + $0x968] sm:$0xff]
    %v492 = vld [vmem:[#allocation7 + $0x970] sm:$0xff]
    %v493 = vld [vmem:[#allocation7 + $0x978] sm:$0xff]
    %v494 = vld [vmem:[#allocation7 + $0x980] sm:$0xff]
    %v495 = vld [vmem:[#allocation7 + $0x988] sm:$0xff]
    %v496 = vld [vmem:[#allocation7 + $0x990] sm:$0xff]
    %v497 = vld [vmem:[#allocation7 + $0x998] sm:$0xff]
    %v498 = vld [vmem:[#allocation7 + $0x9a0] sm:$0xff]
    %v499 = vld [vmem:[#allocation7 + $0x9a8] sm:$0xff]
    %v500 = vld [vmem:[#allocation7 + $0x9b0] sm:$0xff]
    %v501 = vld [vmem:[#allocation7 + $0x9b8] sm:$0xff]
    %v502 = vld [vmem:[#allocation7 + $0x9c0] sm:$0xff]
    %v503 = vld [vmem:[#allocation7 + $0x9c8] sm:$0xff]
    %v504 = vld [vmem:[#allocation7 + $0x9d0] sm:$0xff]
    %v505 = vld [vmem:[#allocation7 + $0x9d8] sm:$0xff]
    %v506 = vld [vmem:[#allocation7 + $0x9e0] sm:$0xff]
    %v507 = vld [vmem:[#allocation7 + $0x9e8] sm:$0xff]
    %v508 = vld [vmem:[#allocation7 + $0x9f0] sm:$0xff]
    %v509 = vld [vmem:[#allocation7 + $0x9f8] sm:$0xff]
    %v510 = vld [vmem:[#allocation7 + $0xa00] sm:$0xff]
    %v511 = vld [vmem:[#allocation7 + $0xa08] sm:$0xff]
    %v512 = vld [vmem:[#allocation7 + $0xa10] sm:$0xff]
    %v513 = vld [vmem:[#allocation7 + $0xa18] sm:$0xff]
    %v514 = vld [vmem:[#allocation7 + $0xa20] sm:$0xff]
    %v515 = vld [vmem:[#allocation7 + $0xa28] sm:$0xff]
    %v516 = vld [vmem:[#allocation7 + $0xa30] sm:$0xff]
    %v517 = vld [vmem:[#allocation7 + $0xa38] sm:$0xff]
    %v518 = vld [vmem:[#allocation7 + $0xa40] sm:$0xff]
    %v519 = vld [vmem:[#allocation7 + $0xa48] sm:$0xff]
    %v520 = vld [vmem:[#allocation7 + $0xa50] sm:$0xff]
    %v521 = vld [vmem:[#allocation7 + $0xa58] sm:$0xff]
    %v522 = vld [vmem:[#allocation7 + $0xa60] sm:$0xff]
    %v523 = vld [vmem:[#allocation7 + $0xa68] sm:$0xff]
    %v524 = vld [vmem:[#allocation7 + $0xa70] sm:$0xff]
    %v525 = vld [vmem:[#allocation7 + $0xa78] sm:$0xff]
    %v526 = vld [vmem:[#allocation7 + $0xa80] sm:$0xff]
    %v527 = vld [vmem:[#allocation7 + $0xa88] sm:$0xff]
    %v528 = vld [vmem:[#allocation7 + $0xa90] sm:$0xff]
    %v529 = vld [vmem:[#allocation7 + $0xa98] sm:$0xff]
    %v530 = vld [vmem:[#allocation7 + $0xaa0] sm:$0xff]
    %v531 = vld [vmem:[#allocation7 + $0xaa8] sm:$0xff]
    %v532 = vld [vmem:[#allocation7 + $0xab0] sm:$0xff]
    %v533 = vld [vmem:[#allocation7 + $0xab8] sm:$0xff]
    %v534 = vld [vmem:[#allocation7 + $0xac0] sm:$0xff]
    %v535 = vld [vmem:[#allocation7 + $0xac8] sm:$0xff]
    %v536 = vld [vmem:[#allocation7 + $0xad0] sm:$0xff]
    %v537 = vld [vmem:[#allocation7 + $0xad8] sm:$0xff]
    %v538 = vld [vmem:[#allocation7 + $0xae0] sm:$0xff]
    %v539 = vld [vmem:[#allocation7 + $0xae8] sm:$0xff]
    %v540 = vld [vmem:[#allocation7 + $0xaf0] sm:$0xff]
    %v541 = vld [vmem:[#allocation7 + $0xaf8] sm:$0xff]
    %v542 = vld [vmem:[#allocation7 + $0xb00] sm:$0xff]
    %v543 = vld [vmem:[#allocation7 + $0xb08] sm:$0xff]
    %v544 = vld [vmem:[#allocation7 + $0xb10] sm:$0xff]
    %v545 = vld [vmem:[#allocation7 + $0xb18] sm:$0xff]
    %v546 = vld [vmem:[#allocation7 + $0xb20] sm:$0xff]
    %v547 = vld [vmem:[#allocation7 + $0xb28] sm:$0xff]
    %v548 = vld [vmem:[#allocation7 + $0xb30] sm:$0xff]
    %v549 = vld [vmem:[#allocation7 + $0xb38] sm:$0xff]
    %v550 = vld [vmem:[#allocation7 + $0xb40] sm:$0xff]
    %v551 = vld [vmem:[#allocation7 + $0xb48] sm:$0xff]
    %v552 = vld [vmem:[#allocation7 + $0xb50] sm:$0xff]
    %v553 = vld [vmem:[#allocation7 + $0xb58] sm:$0xff]
    %v554 = vld [vmem:[#allocation7 + $0xb60] sm:$0xff]
    %v555 = vld [vmem:[#allocation7 + $0xb68] sm:$0xff]
    %v556 = vld [vmem:[#allocation7 + $0xb70] sm:$0xff]
    %v557 = vld [vmem:[#allocation7 + $0xb78] sm:$0xff]
    %v558 = vld [vmem:[#allocation7 + $0xb80] sm:$0xff]
    %v559 = vld [vmem:[#allocation7 + $0xb88] sm:$0xff]
    %v560 = vld [vmem:[#allocation7 + $0xb90] sm:$0xff]
    %v561 = vld [vmem:[#allocation7 + $0xb98] sm:$0xff]
    %v562 = vld [vmem:[#allocation7 + $0xba0] sm:$0xff]
    %v563 = vld [vmem:[#allocation7 + $0xba8] sm:$0xff]
    %v564 = vld [vmem:[#allocation7 + $0xbb0] sm:$0xff]
    %v565 = vld [vmem:[#allocation7 + $0xbb8] sm:$0xff]
    %v566 = vld [vmem:[#allocation7 + $0xbc0] sm:$0xff]
    %v567 = vld [vmem:[#allocation7 + $0xbc8] sm:$0xff]
    %v568 = vld [vmem:[#allocation7 + $0xbd0] sm:$0xff]
    %v569 = vld [vmem:[#allocation7 + $0xbd8] sm:$0xff]
    %v570 = vld [vmem:[#allocation7 + $0xbe0] sm:$0xff]
    %v571 = vld [vmem:[#allocation7 + $0xbe8] sm:$0xff]
    %v572 = vld [vmem:[#allocation7 + $0xbf0] sm:$0xff]
    %v573 = vld [vmem:[#allocation7 + $0xbf8] sm:$0xff]
    %v574 = vld [vmem:[#allocation7 + $0xc00] sm:$0xff]
    %v575 = vld [vmem:[#allocation7 + $0xc08] sm:$0xff]
    %v576 = vld [vmem:[#allocation7 + $0xc10] sm:$0xff]
    %v577 = vld [vmem:[#allocation7 + $0xc18] sm:$0xff]
    %v578 = vld [vmem:[#allocation7 + $0xc20] sm:$0xff]
    %v579 = vld [vmem:[#allocation7 + $0xc28] sm:$0xff]
    %v580 = vld [vmem:[#allocation7 + $0xc30] sm:$0xff]
    %v581 = vld [vmem:[#allocation7 + $0xc38] sm:$0xff]
    %v582 = vld [vmem:[#allocation7 + $0xc40] sm:$0xff]
    %v583 = vld [vmem:[#allocation7 + $0xc48] sm:$0xff]
    %v584 = vld [vmem:[#allocation7 + $0xc50] sm:$0xff]
    %v585 = vld [vmem:[#allocation7 + $0xc58] sm:$0xff]
    %v586 = vld [vmem:[#allocation7 + $0xc60] sm:$0xff]
    %v587 = vld [vmem:[#allocation7 + $0xc68] sm:$0xff]
    %v588 = vld [vmem:[#allocation7 + $0xc70] sm:$0xff]
    %v589 = vld [vmem:[#allocation7 + $0xc78] sm:$0xff]
    %v590 = vld [vmem:[#allocation7 + $0xc80] sm:$0xff]
    %v591 = vld [vmem:[#allocation7 + $0xc88] sm:$0xff]
    %v592 = vld [vmem:[#allocation7 + $0xc90] sm:$0xff]
    %v593 = vld [vmem:[#allocation7 + $0xc98] sm:$0xff]
    %v594 = vld [vmem:[#allocation7 + $0xca0] sm:$0xff]
    %v595 = vld [vmem:[#allocation7 + $0xca8] sm:$0xff]
    %v596 = vld [vmem:[#allocation7 + $0xcb0] sm:$0xff]
    %v597 = vld [vmem:[#allocation7 + $0xcb8] sm:$0xff]
    %v598 = vld [vmem:[#allocation7 + $0xcc0] sm:$0xff]
    %v599 = vld [vmem:[#allocation7 + $0xcc8] sm:$0xff]
    %v600 = vld [vmem:[#allocation7 + $0xcd0] sm:$0xff]
    %v601 = vld [vmem:[#allocation7 + $0xcd8] sm:$0xff]
    %v602 = vld [vmem:[#allocation7 + $0xce0] sm:$0xff]
    %v603 = vld [vmem:[#allocation7 + $0xce8] sm:$0xff]
    %v604 = vld [vmem:[#allocation7 + $0xcf0] sm:$0xff]
    %v605 = vld [vmem:[#allocation7 + $0xcf8] sm:$0xff]
    %v606 = vld [vmem:[#allocation8] sm:$0x3]
    %v608 = vlaneseq
    %v609 = vshrl.u32 %v608, 7
    %v610 = vsub.s32 0, %v609
    %v611 = vrot.slane %v606, %v610
    %v612 = vlaneseq
    %v613 = vshrl.u32 %v612, 7
    %v614 = vsub.s32 1, %v613
    %v615 = vrot.slane %v606, %v614
    %618 = vmatprep.subr.mxu0 %v191
    %619 = vmatpush1.msra.mxu0 %v190
    %620 = vmatprep.subr.mxu0 %v193
    %621 = vmatpush1.msra.mxu0 %v192
    %622 = vmatprep.subr.mxu0 %v195
    %623 = vmatpush1.msra.mxu0 %v194
    %624 = vmatprep.subr.mxu0 %v197
    %625 = vmatpush1.msra.mxu0 %v196
    %626 = vmatprep.subr.mxu0 %v199
    %627 = vmatpush1.msra.mxu0 %v198
    %628 = vmatprep.subr.mxu0 %v201
    %629 = vmatpush1.msra.mxu0 %v200
    %630 = vmatprep.subr.mxu0 %v203
    %631 = vmatpush1.msra.mxu0 %v202
    %632 = vmatprep.subr.mxu0 %v205
    %633 = vmatpush1.msra.mxu0 %v204
    %634 = vmatprep.subr.mxu0 %v207
    %635 = vmatpush1.msra.mxu0 %v206
    %636 = vmatprep.subr.mxu0 %v209
    %637 = vmatpush1.msra.mxu0 %v208
    %638 = vmatprep.subr.mxu0 %v211
    %639 = vmatpush1.msra.mxu0 %v210
    %640 = vmatprep.subr.mxu0 %v213
    %641 = vmatpush1.msra.mxu0 %v212
    %642 = vmatprep.subr.mxu0 %v215
    %643 = vmatpush1.msra.mxu0 %v214
    %644 = vmatprep.subr.mxu0 %v217
    %645 = vmatpush1.msra.mxu0 %v216
    %646 = vmatprep.subr.mxu0 %v219
    %647 = vmatpush1.msra.mxu0 %v218
    %648 = vmatprep.subr.mxu0 %v221
    %649 = vmatpush1.msra.mxu0 %v220
    %650 = vmatprep.subr.mxu0 %v223
    %651 = vmatpush1.msra.mxu0 %v222
    %652 = vmatprep.subr.mxu0 %v225
    %653 = vmatpush1.msra.mxu0 %v224
    %654 = vmatprep.subr.mxu0 %v227
    %655 = vmatpush1.msra.mxu0 %v226
    %656 = vmatprep.subr.mxu0 %v229
    %657 = vmatpush1.msra.mxu0 %v228
    %658 = vmatprep.subr.mxu0 %v231
    %659 = vmatpush1.msra.mxu0 %v230
    %660 = vmatprep.subr.mxu0 %v233
    %661 = vmatpush1.msra.mxu0 %v232
    %662 = vmatprep.subr.mxu0 %v235
    %663 = vmatpush1.msra.mxu0 %v234
    %664 = vmatprep.subr.mxu0 %v237
    %665 = vmatpush1.msra.mxu0 %v236
    %666 = vmatprep.subr.mxu0 %v239
    %667 = vmatpush1.msra.mxu0 %v238
    %668 = vmatprep.subr.mxu0 %v241
    %669 = vmatpush1.msra.mxu0 %v240
    %670 = vmatprep.subr.mxu0 %v243
    %671 = vmatpush1.msra.mxu0 %v242
    %672 = vmatprep.subr.mxu0 %v245
    %673 = vmatpush1.msra.mxu0 %v244
    %674 = vmatprep.subr.mxu0 %v247
    %675 = vmatpush1.msra.mxu0 %v246
    %676 = vmatprep.subr.mxu0 %v249
    %677 = vmatpush1.msra.mxu0 %v248
    %678 = vmatprep.subr.mxu0 %v251
    %679 = vmatpush1.msra.mxu0 %v250
    %680 = vmatprep.subr.mxu0 %v253
    %681 = vmatpush1.msra.mxu0 %v252
    %682 = vmatprep.mubr.f32.mxu0 %v178
    %683 = vmatmul.mubr.f32.gmra.mrb[0].mxu0 %v177
    %v684 = vpop.f32.mrb[0].mxu0
    %v685 = vadd.f32 %v611, %v684
    %v686 = vpop.f32.mrb[0].mxu0
    %v687 = vadd.f32 %v615, %v686
    %688 = vdwg.mxu0
    %689 = vmatprep.subr.mxu0 %v255
    %690 = vmatpush1.msra.mxu0 %v254
    %691 = vmatprep.subr.mxu0 %v257
    %692 = vmatpush1.msra.mxu0 %v256
    %693 = vmatprep.subr.mxu0 %v259
    %694 = vmatpush1.msra.mxu0 %v258
    %695 = vmatprep.subr.mxu0 %v261
    %696 = vmatpush1.msra.mxu0 %v260
    %697 = vmatprep.subr.mxu0 %v263
    %698 = vmatpush1.msra.mxu0 %v262
    %699 = vmatprep.subr.mxu0 %v265
    %700 = vmatpush1.msra.mxu0 %v264
    %701 = vmatprep.subr.mxu0 %v267
    %702 = vmatpush1.msra.mxu0 %v266
    %703 = vmatprep.subr.mxu0 %v269
    %704 = vmatpush1.msra.mxu0 %v268
    %705 = vmatprep.subr.mxu0 %v271
    %706 = vmatpush1.msra.mxu0 %v270
    %707 = vmatprep.subr.mxu0 %v273
    %708 = vmatpush1.msra.mxu0 %v272
    %709 = vmatprep.subr.mxu0 %v275
    %710 = vmatpush1.msra.mxu0 %v274
    %711 = vmatprep.subr.mxu0 %v277
    %712 = vmatpush1.msra.mxu0 %v276
    %713 = vmatprep.subr.mxu0 %v279
    %714 = vmatpush1.msra.mxu0 %v278
    %715 = vmatprep.subr.mxu0 %v281
    %716 = vmatpush1.msra.mxu0 %v280
    %717 = vmatprep.subr.mxu0 %v283
    %718 = vmatpush1.msra.mxu0 %v282
    %719 = vmatprep.subr.mxu0 %v285
    %720 = vmatpush1.msra.mxu0 %v284
    %721 = vmatprep.subr.mxu0 %v287
    %722 = vmatpush1.msra.mxu0 %v286
    %723 = vmatprep.subr.mxu0 %v289
    %724 = vmatpush1.msra.mxu0 %v288
    %725 = vmatprep.subr.mxu0 %v291
    %726 = vmatpush1.msra.mxu0 %v290
    %727 = vmatprep.subr.mxu0 %v293
    %728 = vmatpush1.msra.mxu0 %v292
    %729 = vmatprep.subr.mxu0 %v295
    %730 = vmatpush1.msra.mxu0 %v294
    %731 = vmatprep.subr.mxu0 %v297
    %732 = vmatpush1.msra.mxu0 %v296
    %733 = vmatprep.subr.mxu0 %v299
    %734 = vmatpush1.msra.mxu0 %v298
    %735 = vmatprep.subr.mxu0 %v301
    %736 = vmatpush1.msra.mxu0 %v300
    %737 = vmatprep.subr.mxu0 %v303
    %738 = vmatpush1.msra.mxu0 %v302
    %739 = vmatprep.subr.mxu0 %v305
    %740 = vmatpush1.msra.mxu0 %v304
    %741 = vmatprep.subr.mxu0 %v307
    %742 = vmatpush1.msra.mxu0 %v306
    %743 = vmatprep.subr.mxu0 %v309
    %744 = vmatpush1.msra.mxu0 %v308
    %745 = vmatprep.subr.mxu0 %v311
    %746 = vmatpush1.msra.mxu0 %v310
    %747 = vmatprep.subr.mxu0 %v313
    %748 = vmatpush1.msra.mxu0 %v312
    %749 = vmatprep.subr.mxu0 %v315
    %750 = vmatpush1.msra.mxu0 %v314
    %751 = vmatprep.subr.mxu0 %v317
    %752 = vmatpush1.msra.mxu0 %v316
    %753 = vmatprep.mubr.f32.mxu0 %v180
    %754 = vmatmul.mubr.f32.gmra.mrb[0].mxu0 %v179
    %v755 = vpop.f32.mrb[0].mxu0
    %v756 = vadd.f32 %v685, %v755
    %v757 = vpop.f32.mrb[0].mxu0
    %v758 = vadd.f32 %v687, %v757
    %759 = vdwg.mxu0
    %760 = vmatprep.subr.mxu0 %v319
    %761 = vmatpush1.msra.mxu0 %v318
    %762 = vmatprep.subr.mxu0 %v321
    %763 = vmatpush1.msra.mxu0 %v320
    %764 = vmatprep.subr.mxu0 %v323
    %765 = vmatpush1.msra.mxu0 %v322
    %766 = vmatprep.subr.mxu0 %v325
    %767 = vmatpush1.msra.mxu0 %v324
    %768 = vmatprep.subr.mxu0 %v327
    %769 = vmatpush1.msra.mxu0 %v326
    %770 = vmatprep.subr.mxu0 %v329
    %771 = vmatpush1.msra.mxu0 %v328
    %772 = vmatprep.subr.mxu0 %v331
    %773 = vmatpush1.msra.mxu0 %v330
    %774 = vmatprep.subr.mxu0 %v333
    %775 = vmatpush1.msra.mxu0 %v332
    %776 = vmatprep.subr.mxu0 %v335
    %777 = vmatpush1.msra.mxu0 %v334
    %778 = vmatprep.subr.mxu0 %v337
    %779 = vmatpush1.msra.mxu0 %v336
    %780 = vmatprep.subr.mxu0 %v339
    %781 = vmatpush1.msra.mxu0 %v338
    %782 = vmatprep.subr.mxu0 %v341
    %783 = vmatpush1.msra.mxu0 %v340
    %784 = vmatprep.subr.mxu0 %v343
    %785 = vmatpush1.msra.mxu0 %v342
    %786 = vmatprep.subr.mxu0 %v345
    %787 = vmatpush1.msra.mxu0 %v344
    %788 = vmatprep.subr.mxu0 %v347
    %789 = vmatpush1.msra.mxu0 %v346
    %790 = vmatprep.subr.mxu0 %v349
    %791 = vmatpush1.msra.mxu0 %v348
    %792 = vmatprep.subr.mxu0 %v351
    %793 = vmatpush1.msra.mxu0 %v350
    %794 = vmatprep.subr.mxu0 %v353
    %795 = vmatpush1.msra.mxu0 %v352
    %796 = vmatprep.subr.mxu0 %v355
    %797 = vmatpush1.msra.mxu0 %v354
    %798 = vmatprep.subr.mxu0 %v357
    %799 = vmatpush1.msra.mxu0 %v356
    %800 = vmatprep.subr.mxu0 %v359
    %801 = vmatpush1.msra.mxu0 %v358
    %802 = vmatprep.subr.mxu0 %v361
    %803 = vmatpush1.msra.mxu0 %v360
    %804 = vmatprep.subr.mxu0 %v363
    %805 = vmatpush1.msra.mxu0 %v362
    %806 = vmatprep.subr.mxu0 %v365
    %807 = vmatpush1.msra.mxu0 %v364
    %808 = vmatprep.subr.mxu0 %v367
    %809 = vmatpush1.msra.mxu0 %v366
    %810 = vmatprep.subr.mxu0 %v369
    %811 = vmatpush1.msra.mxu0 %v368
    %812 = vmatprep.subr.mxu0 %v371
    %813 = vmatpush1.msra.mxu0 %v370
    %814 = vmatprep.subr.mxu0 %v373
    %815 = vmatpush1.msra.mxu0 %v372
    %816 = vmatprep.subr.mxu0 %v375
    %817 = vmatpush1.msra.mxu0 %v374
    %818 = vmatprep.subr.mxu0 %v377
    %819 = vmatpush1.msra.mxu0 %v376
    %820 = vmatprep.subr.mxu0 %v379
    %821 = vmatpush1.msra.mxu0 %v378
    %822 = vmatprep.subr.mxu0 %v381
    %823 = vmatpush1.msra.mxu0 %v380
    %824 = vmatprep.mubr.f32.mxu0 %v182
    %825 = vmatmul.mubr.f32.gmra.mrb[0].mxu0 %v181
    %v826 = vpop.f32.mrb[0].mxu0
    %v827 = vadd.f32 %v756, %v826
    %v828 = vpop.f32.mrb[0].mxu0
    %v829 = vadd.f32 %v758, %v828
    %830 = vdwg.mxu0
    %831 = vmatprep.subr.mxu0 %v383
    %832 = vmatpush1.msra.mxu0 %v382
    %833 = vmatprep.subr.mxu0 %v385
    %834 = vmatpush1.msra.mxu0 %v384
    %835 = vmatprep.subr.mxu0 %v387
    %836 = vmatpush1.msra.mxu0 %v386
    %837 = vmatprep.subr.mxu0 %v389
    %838 = vmatpush1.msra.mxu0 %v388
    %839 = vmatprep.subr.mxu0 %v391
    %840 = vmatpush1.msra.mxu0 %v390
    %841 = vmatprep.subr.mxu0 %v393
    %842 = vmatpush1.msra.mxu0 %v392
    %843 = vmatprep.subr.mxu0 %v395
    %844 = vmatpush1.msra.mxu0 %v394
    %845 = vmatprep.subr.mxu0 %v397
    %846 = vmatpush1.msra.mxu0 %v396
    %847 = vmatprep.subr.mxu0 %v399
    %848 = vmatpush1.msra.mxu0 %v398
    %849 = vmatprep.subr.mxu0 %v401
    %850 = vmatpush1.msra.mxu0 %v400
    %851 = vmatprep.subr.mxu0 %v403
    %852 = vmatpush1.msra.mxu0 %v402
    %853 = vmatprep.subr.mxu0 %v405
    %854 = vmatpush1.msra.mxu0 %v404
    %855 = vmatprep.subr.mxu0 %v407
    %856 = vmatpush1.msra.mxu0 %v406
    %857 = vmatprep.subr.mxu0 %v409
    %858 = vmatpush1.msra.mxu0 %v408
    %859 = vmatprep.subr.mxu0 %v411
    %860 = vmatpush1.msra.mxu0 %v410
    %861 = vmatprep.subr.mxu0 %v413
    %862 = vmatpush1.msra.mxu0 %v412
    %863 = vmatprep.subr.mxu0 %v415
    %864 = vmatpush1.msra.mxu0 %v414
    %865 = vmatprep.subr.mxu0 %v417
    %866 = vmatpush1.msra.mxu0 %v416
    %867 = vmatprep.subr.mxu0 %v419
    %868 = vmatpush1.msra.mxu0 %v418
    %869 = vmatprep.subr.mxu0 %v421
    %870 = vmatpush1.msra.mxu0 %v420
    %871 = vmatprep.subr.mxu0 %v423
    %872 = vmatpush1.msra.mxu0 %v422
    %873 = vmatprep.subr.mxu0 %v425
    %874 = vmatpush1.msra.mxu0 %v424
    %875 = vmatprep.subr.mxu0 %v427
    %876 = vmatpush1.msra.mxu0 %v426
    %877 = vmatprep.subr.mxu0 %v429
    %878 = vmatpush1.msra.mxu0 %v428
    %879 = vmatprep.subr.mxu0 %v431
    %880 = vmatpush1.msra.mxu0 %v430
    %881 = vmatprep.subr.mxu0 %v433
    %882 = vmatpush1.msra.mxu0 %v432
    %883 = vmatprep.subr.mxu0 %v435
    %884 = vmatpush1.msra.mxu0 %v434
    %885 = vmatprep.subr.mxu0 %v437
    %886 = vmatpush1.msra.mxu0 %v436
    %887 = vmatprep.subr.mxu0 %v439
    %888 = vmatpush1.msra.mxu0 %v438
    %889 = vmatprep.subr.mxu0 %v441
    %890 = vmatpush1.msra.mxu0 %v440
    %891 = vmatprep.subr.mxu0 %v443
    %892 = vmatpush1.msra.mxu0 %v442
    %893 = vmatprep.subr.mxu0 %v445
    %894 = vmatpush1.msra.mxu0 %v444
    %895 = vmatprep.mubr.f32.mxu0 %v184
    %896 = vmatmul.mubr.f32.gmra.mrb[0].mxu0 %v183
    %v897 = vpop.f32.mrb[0].mxu0
    %v898 = vadd.f32 %v827, %v897
    %v899 = vpop.f32.mrb[0].mxu0
    %v900 = vadd.f32 %v829, %v899
    %901 = vdwg.mxu0
    %902 = vmatprep.subr.mxu0 %v447
    %903 = vmatpush1.msra.mxu0 %v446
    %904 = vmatprep.subr.mxu0 %v449
    %905 = vmatpush1.msra.mxu0 %v448
    %906 = vmatprep.subr.mxu0 %v451
    %907 = vmatpush1.msra.mxu0 %v450
    %908 = vmatprep.subr.mxu0 %v453
    %909 = vmatpush1.msra.mxu0 %v452
    %910 = vmatprep.subr.mxu0 %v455
    %911 = vmatpush1.msra.mxu0 %v454
    %912 = vmatprep.subr.mxu0 %v457
    %913 = vmatpush1.msra.mxu0 %v456
    %914 = vmatprep.subr.mxu0 %v459
    %915 = vmatpush1.msra.mxu0 %v458
    %916 = vmatprep.subr.mxu0 %v461
    %917 = vmatpush1.msra.mxu0 %v460
    %918 = vmatprep.subr.mxu0 %v463
    %919 = vmatpush1.msra.mxu0 %v462
    %920 = vmatprep.subr.mxu0 %v465
    %921 = vmatpush1.msra.mxu0 %v464
    %922 = vmatprep.subr.mxu0 %v467
    %923 = vmatpush1.msra.mxu0 %v466
    %924 = vmatprep.subr.mxu0 %v469
    %925 = vmatpush1.msra.mxu0 %v468
    %926 = vmatprep.subr.mxu0 %v471
    %927 = vmatpush1.msra.mxu0 %v470
    %928 = vmatprep.subr.mxu0 %v473
    %929 = vmatpush1.msra.mxu0 %v472
    %930 = vmatprep.subr.mxu0 %v475
    %931 = vmatpush1.msra.mxu0 %v474
    %932 = vmatprep.subr.mxu0 %v477
    %933 = vmatpush1.msra.mxu0 %v476
    %934 = vmatprep.subr.mxu0 %v479
    %935 = vmatpush1.msra.mxu0 %v478
    %936 = vmatprep.subr.mxu0 %v481
    %937 = vmatpush1.msra.mxu0 %v480
    %938 = vmatprep.subr.mxu0 %v483
    %939 = vmatpush1.msra.mxu0 %v482
    %940 = vmatprep.subr.mxu0 %v485
    %941 = vmatpush1.msra.mxu0 %v484
    %942 = vmatprep.subr.mxu0 %v487
    %943 = vmatpush1.msra.mxu0 %v486
    %944 = vmatprep.subr.mxu0 %v489
    %945 = vmatpush1.msra.mxu0 %v488
    %946 = vmatprep.subr.mxu0 %v491
    %947 = vmatpush1.msra.mxu0 %v490
    %948 = vmatprep.subr.mxu0 %v493
    %949 = vmatpush1.msra.mxu0 %v492
    %950 = vmatprep.subr.mxu0 %v495
    %951 = vmatpush1.msra.mxu0 %v494
    %952 = vmatprep.subr.mxu0 %v497
    %953 = vmatpush1.msra.mxu0 %v496
    %954 = vmatprep.subr.mxu0 %v499
    %955 = vmatpush1.msra.mxu0 %v498
    %956 = vmatprep.subr.mxu0 %v501
    %957 = vmatpush1.msra.mxu0 %v500
    %958 = vmatprep.subr.mxu0 %v503
    %959 = vmatpush1.msra.mxu0 %v502
    %960 = vmatprep.subr.mxu0 %v505
    %961 = vmatpush1.msra.mxu0 %v504
    %962 = vmatprep.subr.mxu0 %v507
    %963 = vmatpush1.msra.mxu0 %v506
    %964 = vmatprep.subr.mxu0 %v509
    %965 = vmatpush1.msra.mxu0 %v508
    %966 = vmatprep.mubr.f32.mxu0 %v186
    %967 = vmatmul.mubr.f32.gmra.mrb[0].mxu0 %v185
    %v968 = vpop.f32.mrb[0].mxu0
    %v969 = vadd.f32 %v898, %v968
    %v970 = vpop.f32.mrb[0].mxu0
    %v971 = vadd.f32 %v900, %v970
    %972 = vdwg.mxu0
    %973 = vmatprep.subr.mxu0 %v511
    %974 = vmatpush1.msra.mxu0 %v510
    %975 = vmatprep.subr.mxu0 %v513
    %976 = vmatpush1.msra.mxu0 %v512
    %977 = vmatprep.subr.mxu0 %v515
    %978 = vmatpush1.msra.mxu0 %v514
    %979 = vmatprep.subr.mxu0 %v517
    %980 = vmatpush1.msra.mxu0 %v516
    %981 = vmatprep.subr.mxu0 %v519
    %982 = vmatpush1.msra.mxu0 %v518
    %983 = vmatprep.subr.mxu0 %v521
    %984 = vmatpush1.msra.mxu0 %v520
    %985 = vmatprep.subr.mxu0 %v523
    %986 = vmatpush1.msra.mxu0 %v522
    %987 = vmatprep.subr.mxu0 %v525
    %988 = vmatpush1.msra.mxu0 %v524
    %989 = vmatprep.subr.mxu0 %v527
    %990 = vmatpush1.msra.mxu0 %v526
    %991 = vmatprep.subr.mxu0 %v529
    %992 = vmatpush1.msra.mxu0 %v528
    %993 = vmatprep.subr.mxu0 %v531
    %994 = vmatpush1.msra.mxu0 %v530
    %995 = vmatprep.subr.mxu0 %v533
    %996 = vmatpush1.msra.mxu0 %v532
    %997 = vmatprep.subr.mxu0 %v535
    %998 = vmatpush1.msra.mxu0 %v534
    %999 = vmatprep.subr.mxu0 %v537
    %1000 = vmatpush1.msra.mxu0 %v536
    %1001 = vmatprep.subr.mxu0 %v539
    %1002 = vmatpush1.msra.mxu0 %v538
    %1003 = vmatprep.subr.mxu0 %v541
    %1004 = vmatpush1.msra.mxu0 %v540
    %1005 = vmatprep.subr.mxu0 %v543
    %1006 = vmatpush1.msra.mxu0 %v542
    %1007 = vmatprep.subr.mxu0 %v545
    %1008 = vmatpush1.msra.mxu0 %v544
    %1009 = vmatprep.subr.mxu0 %v547
    %1010 = vmatpush1.msra.mxu0 %v546
    %1011 = vmatprep.subr.mxu0 %v549
    %1012 = vmatpush1.msra.mxu0 %v548
    %1013 = vmatprep.subr.mxu0 %v551
    %1014 = vmatpush1.msra.mxu0 %v550
    %1015 = vmatprep.subr.mxu0 %v553
    %1016 = vmatpush1.msra.mxu0 %v552
    %1017 = vmatprep.subr.mxu0 %v555
    %1018 = vmatpush1.msra.mxu0 %v554
    %1019 = vmatprep.subr.mxu0 %v557
    %1020 = vmatpush1.msra.mxu0 %v556
    %1021 = vmatprep.subr.mxu0 %v559
    %1022 = vmatpush1.msra.mxu0 %v558
    %1023 = vmatprep.subr.mxu0 %v561
    %1024 = vmatpush1.msra.mxu0 %v560
    %1025 = vmatprep.subr.mxu0 %v563
    %1026 = vmatpush1.msra.mxu0 %v562
    %1027 = vmatprep.subr.mxu0 %v565
    %1028 = vmatpush1.msra.mxu0 %v564
    %1029 = vmatprep.subr.mxu0 %v567
    %1030 = vmatpush1.msra.mxu0 %v566
    %1031 = vmatprep.subr.mxu0 %v569
    %1032 = vmatpush1.msra.mxu0 %v568
    %1033 = vmatprep.subr.mxu0 %v571
    %1034 = vmatpush1.msra.mxu0 %v570
    %1035 = vmatprep.subr.mxu0 %v573
    %1036 = vmatpush1.msra.mxu0 %v572
    %1037 = vmatprep.mubr.f32.mxu0 %v188
    %1038 = vmatmul.mubr.f32.gmra.mrb[0].mxu0 %v187
    %v1039 = vpop.f32.mrb[0].mxu0
    %v1040 = vadd.f32 %v969, %v1039
    %v1041 = vpop.f32.mrb[0].mxu0
    %v1042 = vadd.f32 %v971, %v1041
    %1043 = vdwg.mxu0
    %1044 = vmatprep.subr.mxu0 %v575
    %1045 = vmatpush1.msra.mxu0 %v574
    %1046 = vmatprep.subr.mxu0 %v577
    %1047 = vmatpush1.msra.mxu0 %v576
    %1048 = vmatprep.subr.mxu0 %v579
    %1049 = vmatpush1.msra.mxu0 %v578
    %1050 = vmatprep.subr.mxu0 %v581
    %1051 = vmatpush1.msra.mxu0 %v580
    %1052 = vmatprep.subr.mxu0 %v583
    %1053 = vmatpush1.msra.mxu0 %v582
    %1054 = vmatprep.subr.mxu0 %v585
    %1055 = vmatpush1.msra.mxu0 %v584
    %1056 = vmatprep.subr.mxu0 %v587
    %1057 = vmatpush1.msra.mxu0 %v586
    %1058 = vmatprep.subr.mxu0 %v589
    %1059 = vmatpush1.msra.mxu0 %v588
    %1060 = vmatprep.subr.mxu0 %v591
    %1061 = vmatpush1.msra.mxu0 %v590
    %1062 = vmatprep.subr.mxu0 %v593
    %1063 = vmatpush1.msra.mxu0 %v592
    %1064 = vmatprep.subr.mxu0 %v595
    %1065 = vmatpush1.msra.mxu0 %v594
    %1066 = vmatprep.subr.mxu0 %v597
    %1067 = vmatpush1.msra.mxu0 %v596
    %1068 = vmatprep.subr.mxu0 %v599
    %1069 = vmatpush1.msra.mxu0 %v598
    %1070 = vmatprep.subr.mxu0 %v601
    %1071 = vmatpush1.msra.mxu0 %v600
    %1072 = vmatprep.subr.mxu0 %v603
    %1073 = vmatpush1.msra.mxu0 %v602
    %1074 = vmatprep.subr.mxu0 %v605
    %1075 = vmatpush1.msra.mxu0 %v604
    %1076 = vmatprep.subr.mxu0 0.0
    %1077 = vmatpush1.msra.mxu0 0.0
    %1078 = vmatprep.subr.mxu0 0.0
    %1079 = vmatpush1.msra.mxu0 0.0
    %1080 = vmatprep.subr.mxu0 0.0
    %1081 = vmatpush1.msra.mxu0 0.0
    %1082 = vmatprep.subr.mxu0 0.0
    %1083 = vmatpush1.msra.mxu0 0.0
    %1084 = vmatprep.subr.mxu0 0.0
    %1085 = vmatpush1.msra.mxu0 0.0
    %1086 = vmatprep.subr.mxu0 0.0
    %1087 = vmatpush1.msra.mxu0 0.0
    %1088 = vmatprep.subr.mxu0 0.0
    %1089 = vmatpush1.msra.mxu0 0.0
    %1090 = vmatprep.subr.mxu0 0.0
    %1091 = vmatpush1.msra.mxu0 0.0
    %1092 = vmatprep.subr.mxu0 0.0
    %1093 = vmatpush1.msra.mxu0 0.0
    %1094 = vmatprep.subr.mxu0 0.0
    %1095 = vmatpush1.msra.mxu0 0.0
    %1096 = vmatprep.subr.mxu0 0.0
    %1097 = vmatpush1.msra.mxu0 0.0
    %1098 = vmatprep.subr.mxu0 0.0
    %1099 = vmatpush1.msra.mxu0 0.0
    %1100 = vmatprep.subr.mxu0 0.0
    %1101 = vmatpush1.msra.mxu0 0.0
    %1102 = vmatprep.subr.mxu0 0.0
    %1103 = vmatpush1.msra.mxu0 0.0
    %1104 = vmatprep.subr.mxu0 0.0
    %1105 = vmatpush1.msra.mxu0 0.0
    %1106 = vmatprep.subr.mxu0 0.0
    %1107 = vmatpush1.msra.mxu0 0.0
    %1108 = vmatprep.mubr.f32.mxu0 0.0
    %1109 = vmatmul.mubr.f32.gmra.mrb[0].mxu0 %v189
    %v1110 = vpop.f32.mrb[0].mxu0
    %v1111 = vadd.f32 %v1040, %v1110
    %v1112 = vpop.f32.mrb[0].mxu0
    %v1113 = vadd.f32 %v1042, %v1112
    %1114 = vdwg.mxu0
    %v1115 = vmax.f32 %v1111, 0.0
    %v1116 = vmax.f32 %v1113, 0.0
    %v1117 = vld [vmem:[%s4] sm:$0xff]
    %v1118 = vld [vmem:[%s4 + $0x8] sm:$0xff]
    %v1119 = vld [vmem:[%s4 + $0x10] sm:$0xff]
    %v1120 = vld [vmem:[%s4 + $0x18] sm:$0xff]
    %v1121 = vld [vmem:[%s4 + $0x20] sm:$0xff]
    %v1122 = vld [vmem:[%s4 + $0x28] sm:$0xff]
    %v1123 = vld [vmem:[%s4 + $0x30] sm:$0xff]
    %v1124 = vld [vmem:[%s4 + $0x38] sm:$0xff]
    %v1125 = vld [vmem:[%s4 + $0x40] sm:$0xff]
    %v1126 = vld [vmem:[%s4 + $0x48] sm:$0xff]
    %v1127 = vld [vmem:[%s4 + $0x50] sm:$0xff]
    %v1128 = vld [vmem:[%s4 + $0x58] sm:$0xff]
    %v1129 = vld [vmem:[%s4 + $0x60] sm:$0xff]
    %v1130 = vld [vmem:[%s4 + $0x68] sm:$0xff]
    %v1131 = vld [vmem:[%s4 + $0x70] sm:$0xff]
    %v1132 = vld [vmem:[%s4 + $0x78] sm:$0xff]
    %v1133 = vld [vmem:[%s4 + $0x80] sm:$0xff]
    %v1134 = vld [vmem:[%s4 + $0x88] sm:$0xff]
    %v1135 = vld [vmem:[%s4 + $0x90] sm:$0xff]
    %v1136 = vld [vmem:[%s4 + $0x98] sm:$0xff]
    %v1137 = vld [vmem:[%s4 + $0xa0] sm:$0xff]
    %v1138 = vld [vmem:[%s4 + $0xa8] sm:$0xff]
    %v1139 = vld [vmem:[%s4 + $0xb0] sm:$0xff]
    %v1140 = vld [vmem:[%s4 + $0xb8] sm:$0xff]
    %v1141 = vld [vmem:[%s4 + $0xc0] sm:$0xff]
    %v1142 = vld [vmem:[%s4 + $0xc8] sm:$0xff]
    %v1143 = vld [vmem:[%s4 + $0xd0] sm:$0xff]
    %v1144 = vld [vmem:[%s4 + $0xd8] sm:$0xff]
    %v1145 = vld [vmem:[%s4 + $0xe0] sm:$0xff]
    %v1146 = vld [vmem:[%s4 + $0xe8] sm:$0xff]
    %v1147 = vld [vmem:[%s4 + $0xf0] sm:$0xff]
    %v1148 = vld [vmem:[%s4 + $0xf8] sm:$0xff]
    %v1149 = vld [vmem:[#allocation10] sm:$0x1]
    %v1151 = vlaneseq
    %v1152 = vshrl.u32 %v1151, 7
    %v1153 = vsub.s32 0, %v1152
    %v1154 = vrot.slane %v1149, %v1153
    %1156 = vmatprep.subr.mxu0 0.0
    %1157 = vmatpush1.msra.mxu0 %v1117
    %1158 = vmatprep.subr.mxu0 0.0
    %1159 = vmatpush1.msra.mxu0 %v1118
    %1160 = vmatprep.subr.mxu0 0.0
    %1161 = vmatpush1.msra.mxu0 %v1119
    %1162 = vmatprep.subr.mxu0 0.0
    %1163 = vmatpush1.msra.mxu0 %v1120
    %1164 = vmatprep.subr.mxu0 0.0
    %1165 = vmatpush1.msra.mxu0 %v1121
    %1166 = vmatprep.subr.mxu0 0.0
    %1167 = vmatpush1.msra.mxu0 %v1122
    %1168 = vmatprep.subr.mxu0 0.0
    %1169 = vmatpush1.msra.mxu0 %v1123
    %1170 = vmatprep.subr.mxu0 0.0
    %1171 = vmatpush1.msra.mxu0 %v1124
    %1172 = vmatprep.subr.mxu0 0.0
    %1173 = vmatpush1.msra.mxu0 %v1125
    %1174 = vmatprep.subr.mxu0 0.0
    %1175 = vmatpush1.msra.mxu0 %v1126
    %1176 = vmatprep.subr.mxu0 0.0
    %1177 = vmatpush1.msra.mxu0 %v1127
    %1178 = vmatprep.subr.mxu0 0.0
    %1179 = vmatpush1.msra.mxu0 %v1128
    %1180 = vmatprep.subr.mxu0 0.0
    %1181 = vmatpush1.msra.mxu0 %v1129
    %1182 = vmatprep.subr.mxu0 0.0
    %1183 = vmatpush1.msra.mxu0 %v1130
    %1184 = vmatprep.subr.mxu0 0.0
    %1185 = vmatpush1.msra.mxu0 %v1131
    %1186 = vmatprep.subr.mxu0 0.0
    %1187 = vmatpush1.msra.mxu0 %v1132
    %1188 = vmatprep.subr.mxu0 0.0
    %1189 = vmatpush1.msra.mxu0 %v1133
    %1190 = vmatprep.subr.mxu0 0.0
    %1191 = vmatpush1.msra.mxu0 %v1134
    %1192 = vmatprep.subr.mxu0 0.0
    %1193 = vmatpush1.msra.mxu0 %v1135
    %1194 = vmatprep.subr.mxu0 0.0
    %1195 = vmatpush1.msra.mxu0 %v1136
    %1196 = vmatprep.subr.mxu0 0.0
    %1197 = vmatpush1.msra.mxu0 %v1137
    %1198 = vmatprep.subr.mxu0 0.0
    %1199 = vmatpush1.msra.mxu0 %v1138
    %1200 = vmatprep.subr.mxu0 0.0
    %1201 = vmatpush1.msra.mxu0 %v1139
    %1202 = vmatprep.subr.mxu0 0.0
    %1203 = vmatpush1.msra.mxu0 %v1140
    %1204 = vmatprep.subr.mxu0 0.0
    %1205 = vmatpush1.msra.mxu0 %v1141
    %1206 = vmatprep.subr.mxu0 0.0
    %1207 = vmatpush1.msra.mxu0 %v1142
    %1208 = vmatprep.subr.mxu0 0.0
    %1209 = vmatpush1.msra.mxu0 %v1143
    %1210 = vmatprep.subr.mxu0 0.0
    %1211 = vmatpush1.msra.mxu0 %v1144
    %1212 = vmatprep.subr.mxu0 0.0
    %1213 = vmatpush1.msra.mxu0 %v1145
    %1214 = vmatprep.subr.mxu0 0.0
    %1215 = vmatpush1.msra.mxu0 %v1146
    %1216 = vmatprep.subr.mxu0 0.0
    %1217 = vmatpush1.msra.mxu0 %v1147
    %1218 = vmatprep.subr.mxu0 0.0
    %1219 = vmatpush1.msra.mxu0 %v1148
    %1220 = vmatprep.mubr.f32.mxu0 %v1116
    %1221 = vmatmul.mubr.f32.gmra.mrb[0].mxu0 %v1115
    %v1222 = vpop.f32.mrb[0].mxu0
    %v1223 = vadd.f32 %v1154, %v1222
    %v1224 = vpop.f32.mrb[0].mxu0
    %1225 = vdwg.mxu0
    %v1226 = vmax.f32 %v1223, 0.0
    %v1227 = vld [vmem:[#allocation5] sm:$0xff]
    %v1228 = vld [vmem:[#allocation11] sm:$0xff]
    %v1229 = vld [vmem:[#allocation11 + $0x8] sm:$0x1]
    %v1230 = vld [vmem:[#allocation13] sm:$0x1]
    %v1232 = vlaneseq
    %v1233 = vshrl.u32 %v1232, 7
    %v1234 = vsub.s32 0, %v1233
    %v1235 = vrot.slane %v1230, %v1234
    %vm1237 = vcmask 72704
    %v1239 = vsel %vm1237, %v1227, 0
    %vm1241 = vcmask 1040384
    %v1243 = vsel %vm1241, %v1229, 0
    %1245 = vmatprep.subr.mxu0 0.0
    %1246 = vmatpush1.msra.mxu0 %v1228
    %1247 = vmatprep.subr.mxu0 0.0
    %1248 = vmatpush1.msra.mxu0 %v1243
    %1249 = vmatprep.subr.mxu0 0.0
    %1250 = vmatpush1.msra.mxu0 0.0
    %1251 = vmatprep.subr.mxu0 0.0
    %1252 = vmatpush1.msra.mxu0 0.0
    %1253 = vmatprep.subr.mxu0 0.0
    %1254 = vmatpush1.msra.mxu0 0.0
    %1255 = vmatprep.subr.mxu0 0.0
    %1256 = vmatpush1.msra.mxu0 0.0
    %1257 = vmatprep.subr.mxu0 0.0
    %1258 = vmatpush1.msra.mxu0 0.0
    %1259 = vmatprep.subr.mxu0 0.0
    %1260 = vmatpush1.msra.mxu0 0.0
    %1261 = vmatprep.subr.mxu0 0.0
    %1262 = vmatpush1.msra.mxu0 0.0
    %1263 = vmatprep.subr.mxu0 0.0
    %1264 = vmatpush1.msra.mxu0 0.0
    %1265 = vmatprep.subr.mxu0 0.0
    %1266 = vmatpush1.msra.mxu0 0.0
    %1267 = vmatprep.subr.mxu0 0.0
    %1268 = vmatpush1.msra.mxu0 0.0
    %1269 = vmatprep.subr.mxu0 0.0
    %1270 = vmatpush1.msra.mxu0 0.0
    %1271 = vmatprep.subr.mxu0 0.0
    %1272 = vmatpush1.msra.mxu0 0.0
    %1273 = vmatprep.subr.mxu0 0.0
    %1274 = vmatpush1.msra.mxu0 0.0
    %1275 = vmatprep.subr.mxu0 0.0
    %1276 = vmatpush1.msra.mxu0 0.0
    %1277 = vmatprep.subr.mxu0 0.0
    %1278 = vmatpush1.msra.mxu0 0.0
    %1279 = vmatprep.subr.mxu0 0.0
    %1280 = vmatpush1.msra.mxu0 0.0
    %1281 = vmatprep.subr.mxu0 0.0
    %1282 = vmatpush1.msra.mxu0 0.0
    %1283 = vmatprep.subr.mxu0 0.0
    %1284 = vmatpush1.msra.mxu0 0.0
    %1285 = vmatprep.subr.mxu0 0.0
    %1286 = vmatpush1.msra.mxu0 0.0
    %1287 = vmatprep.subr.mxu0 0.0
    %1288 = vmatpush1.msra.mxu0 0.0
    %1289 = vmatprep.subr.mxu0 0.0
    %1290 = vmatpush1.msra.mxu0 0.0
    %1291 = vmatprep.subr.mxu0 0.0
    %1292 = vmatpush1.msra.mxu0 0.0
    %1293 = vmatprep.subr.mxu0 0.0
    %1294 = vmatpush1.msra.mxu0 0.0
    %1295 = vmatprep.subr.mxu0 0.0
    %1296 = vmatpush1.msra.mxu0 0.0
    %1297 = vmatprep.subr.mxu0 0.0
    %1298 = vmatpush1.msra.mxu0 0.0
    %1299 = vmatprep.subr.mxu0 0.0
    %1300 = vmatpush1.msra.mxu0 0.0
    %1301 = vmatprep.subr.mxu0 0.0
    %1302 = vmatpush1.msra.mxu0 0.0
    %1303 = vmatprep.subr.mxu0 0.0
    %1304 = vmatpush1.msra.mxu0 0.0
    %1305 = vmatprep.subr.mxu0 0.0
    %1306 = vmatpush1.msra.mxu0 0.0
    %1307 = vmatprep.subr.mxu0 0.0
    %1308 = vmatpush1.msra.mxu0 0.0
    %1309 = vmatprep.mubr.f32.mxu0 0.0
    %1310 = vmatmul.mubr.f32.gmra.mrb[0].mxu0 %v1239
    %v1311 = vpop.f32.mrb[0].mxu0
    %v1312 = vadd.f32 %v1235, %v1311
    %v1313 = vpop.f32.mrb[0].mxu0
    %1314 = vdwg.mxu0
    %v1315 = vmax.f32 %v1312, 0.0
    %v1316 = vld [vmem:[#allocation14] sm:$0xff]
    %v1317 = vld [vmem:[#allocation14 + $0x8] sm:$0xff]
    %v1318 = vld [vmem:[#allocation14 + $0x10] sm:$0xff]
    %v1319 = vld [vmem:[#allocation14 + $0x18] sm:$0xff]
    %v1320 = vld [vmem:[#allocation14 + $0x20] sm:$0xff]
    %v1321 = vld [vmem:[#allocation14 + $0x28] sm:$0xff]
    %v1322 = vld [vmem:[#allocation14 + $0x30] sm:$0xff]
    %v1323 = vld [vmem:[#allocation14 + $0x38] sm:$0xff]
    %v1324 = vld [vmem:[#allocation16] sm:$0x1]
    %v1326 = vlaneseq
    %v1327 = vshrl.u32 %v1326, 7
    %v1328 = vsub.s32 0, %v1327
    %v1329 = vrot.slane %v1324, %v1328
    %vm1331 = vcmask 523264
    %v1333 = vsel %vm1331, %v1315, 0
    %1335 = vmatprep.subr.mxu0 0.0
    %1336 = vmatpush1.msra.mxu0 %v1316
    %1337 = vmatprep.subr.mxu0 0.0
    %1338 = vmatpush1.msra.mxu0 %v1317
    %1339 = vmatprep.subr.mxu0 0.0
    %1340 = vmatpush1.msra.mxu0 %v1318
    %1341 = vmatprep.subr.mxu0 0.0
    %1342 = vmatpush1.msra.mxu0 %v1319
    %1343 = vmatprep.subr.mxu0 0.0
    %1344 = vmatpush1.msra.mxu0 %v1320
    %1345 = vmatprep.subr.mxu0 0.0
    %1346 = vmatpush1.msra.mxu0 %v1321
    %1347 = vmatprep.subr.mxu0 0.0
    %1348 = vmatpush1.msra.mxu0 %v1322
    %1349 = vmatprep.subr.mxu0 0.0
    %1350 = vmatpush1.msra.mxu0 %v1323
    %1351 = vmatprep.subr.mxu0 0.0
    %1352 = vmatpush1.msra.mxu0 0.0
    %1353 = vmatprep.subr.mxu0 0.0
    %1354 = vmatpush1.msra.mxu0 0.0
    %1355 = vmatprep.subr.mxu0 0.0
    %1356 = vmatpush1.msra.mxu0 0.0
    %1357 = vmatprep.subr.mxu0 0.0
    %1358 = vmatpush1.msra.mxu0 0.0
    %1359 = vmatprep.subr.mxu0 0.0
    %1360 = vmatpush1.msra.mxu0 0.0
    %1361 = vmatprep.subr.mxu0 0.0
    %1362 = vmatpush1.msra.mxu0 0.0
    %1363 = vmatprep.subr.mxu0 0.0
    %1364 = vmatpush1.msra.mxu0 0.0
    %1365 = vmatprep.subr.mxu0 0.0
    %1366 = vmatpush1.msra.mxu0 0.0
    %1367 = vmatprep.subr.mxu0 0.0
    %1368 = vmatpush1.msra.mxu0 0.0
    %1369 = vmatprep.subr.mxu0 0.0
    %1370 = vmatpush1.msra.mxu0 0.0
    %1371 = vmatprep.subr.mxu0 0.0
    %1372 = vmatpush1.msra.mxu0 0.0
    %1373 = vmatprep.subr.mxu0 0.0
    %1374 = vmatpush1.msra.mxu0 0.0
    %1375 = vmatprep.subr.mxu0 0.0
    %1376 = vmatpush1.msra.mxu0 0.0
    %1377 = vmatprep.subr.mxu0 0.0
    %1378 = vmatpush1.msra.mxu0 0.0
    %1379 = vmatprep.subr.mxu0 0.0
    %1380 = vmatpush1.msra.mxu0 0.0
    %1381 = vmatprep.subr.mxu0 0.0
    %1382 = vmatpush1.msra.mxu0 0.0
    %1383 = vmatprep.subr.mxu0 0.0
    %1384 = vmatpush1.msra.mxu0 0.0
    %1385 = vmatprep.subr.mxu0 0.0
    %1386 = vmatpush1.msra.mxu0 0.0
    %1387 = vmatprep.subr.mxu0 0.0
    %1388 = vmatpush1.msra.mxu0 0.0
    %1389 = vmatprep.subr.mxu0 0.0
    %1390 = vmatpush1.msra.mxu0 0.0
    %1391 = vmatprep.subr.mxu0 0.0
    %1392 = vmatpush1.msra.mxu0 0.0
    %1393 = vmatprep.subr.mxu0 0.0
    %1394 = vmatpush1.msra.mxu0 0.0
    %1395 = vmatprep.subr.mxu0 0.0
    %1396 = vmatpush1.msra.mxu0 0.0
    %1397 = vmatprep.subr.mxu0 0.0
    %1398 = vmatpush1.msra.mxu0 0.0
    %1399 = vmatprep.mubr.f32.mxu0 0.0
    %1400 = vmatmul.mubr.f32.gmra.mrb[0].mxu0 %v1333
    %v1401 = vpop.f32.mrb[0].mxu0
    %v1402 = vadd.f32 %v1329, %v1401
    %v1403 = vpop.f32.mrb[0].mxu0
    %1404 = vdwg.mxu0
    %v1405 = vmax.f32 %v1402, 0.0
    %v1406 = vld [vmem:[#allocation17] sm:$0xff]
    %v1407 = vld [vmem:[#allocation17 + $0x8] sm:$0xff]
    %v1408 = vld [vmem:[#allocation17 + $0x10] sm:$0xff]
    %v1409 = vld [vmem:[#allocation17 + $0x18] sm:$0xff]
    %v1410 = vld [vmem:[#allocation17 + $0x20] sm:$0xff]
    %v1411 = vld [vmem:[#allocation17 + $0x28] sm:$0xff]
    %v1412 = vld [vmem:[#allocation17 + $0x30] sm:$0xff]
    %v1413 = vld [vmem:[#allocation17 + $0x38] sm:$0xff]
    %v1414 = vld [vmem:[#allocation17 + $0x40] sm:$0xff]
    %v1415 = vld [vmem:[#allocation17 + $0x48] sm:$0xff]
    %v1416 = vld [vmem:[#allocation17 + $0x50] sm:$0xff]
    %v1417 = vld [vmem:[#allocation17 + $0x58] sm:$0xff]
    %v1418 = vld [vmem:[#allocation17 + $0x60] sm:$0xff]
    %v1419 = vld [vmem:[#allocation17 + $0x68] sm:$0xff]
    %v1420 = vld [vmem:[#allocation17 + $0x70] sm:$0xff]
    %v1421 = vld [vmem:[#allocation17 + $0x78] sm:$0xff]
    %v1423 = vsel %vm1331, %v1226, 0
    %1425 = vmatprep.subr.mxu0 0.0
    %1426 = vmatpush1.msra.mxu0 %v1414
    %1427 = vmatprep.subr.mxu0 0.0
    %1428 = vmatpush1.msra.mxu0 %v1415
    %1429 = vmatprep.subr.mxu0 0.0
    %1430 = vmatpush1.msra.mxu0 %v1416
    %1431 = vmatprep.subr.mxu0 0.0
    %1432 = vmatpush1.msra.mxu0 %v1417
    %1433 = vmatprep.subr.mxu0 0.0
    %1434 = vmatpush1.msra.mxu0 %v1418
    %1435 = vmatprep.subr.mxu0 0.0
    %1436 = vmatpush1.msra.mxu0 %v1419
    %1437 = vmatprep.subr.mxu0 0.0
    %1438 = vmatpush1.msra.mxu0 %v1420
    %1439 = vmatprep.subr.mxu0 0.0
    %1440 = vmatpush1.msra.mxu0 %v1421
    %1441 = vmatprep.subr.mxu0 0.0
    %1442 = vmatpush1.msra.mxu0 0.0
    %1443 = vmatprep.subr.mxu0 0.0
    %1444 = vmatpush1.msra.mxu0 0.0
    %1445 = vmatprep.subr.mxu0 0.0
    %1446 = vmatpush1.msra.mxu0 0.0
    %1447 = vmatprep.subr.mxu0 0.0
    %1448 = vmatpush1.msra.mxu0 0.0
    %1449 = vmatprep.subr.mxu0 0.0
    %1450 = vmatpush1.msra.mxu0 0.0
    %1451 = vmatprep.subr.mxu0 0.0
    %1452 = vmatpush1.msra.mxu0 0.0
    %1453 = vmatprep.subr.mxu0 0.0
    %1454 = vmatpush1.msra.mxu0 0.0
    %1455 = vmatprep.subr.mxu0 0.0
    %1456 = vmatpush1.msra.mxu0 0.0
    %1457 = vmatprep.subr.mxu0 0.0
    %1458 = vmatpush1.msra.mxu0 0.0
    %1459 = vmatprep.subr.mxu0 0.0
    %1460 = vmatpush1.msra.mxu0 0.0
    %1461 = vmatprep.subr.mxu0 0.0
    %1462 = vmatpush1.msra.mxu0 0.0
    %1463 = vmatprep.subr.mxu0 0.0
    %1464 = vmatpush1.msra.mxu0 0.0
    %1465 = vmatprep.subr.mxu0 0.0
    %1466 = vmatpush1.msra.mxu0 0.0
    %1467 = vmatprep.subr.mxu0 0.0
    %1468 = vmatpush1.msra.mxu0 0.0
    %1469 = vmatprep.subr.mxu0 0.0
    %1470 = vmatpush1.msra.mxu0 0.0
    %1471 = vmatprep.subr.mxu0 0.0
    %1472 = vmatpush1.msra.mxu0 0.0
    %1473 = vmatprep.subr.mxu0 0.0
    %1474 = vmatpush1.msra.mxu0 0.0
    %1475 = vmatprep.subr.mxu0 0.0
    %1476 = vmatpush1.msra.mxu0 0.0
    %1477 = vmatprep.subr.mxu0 0.0
    %1478 = vmatpush1.msra.mxu0 0.0
    %1479 = vmatprep.subr.mxu0 0.0
    %1480 = vmatpush1.msra.mxu0 0.0
    %1481 = vmatprep.subr.mxu0 0.0
    %1482 = vmatpush1.msra.mxu0 0.0
    %1483 = vmatprep.subr.mxu0 0.0
    %1484 = vmatpush1.msra.mxu0 0.0
    %1485 = vmatprep.subr.mxu0 0.0
    %1486 = vmatpush1.msra.mxu0 0.0
    %1487 = vmatprep.subr.mxu0 0.0
    %1488 = vmatpush1.msra.mxu0 0.0
    %1489 = vmatprep.mubr.f32.mxu0 0.0
    %1490 = vmatmul.mubr.f32.gmra.mrb[0].mxu0 %v1423
    %v1491 = vpop.f32.mrb[0].mxu0
    %v1492 = vadd.f32 0.0, %v1491
    %v1493 = vpop.f32.mrb[0].mxu0
    %1494 = vdwg.mxu0
    %v1496 = vsel %vm1331, %v1405, 0
    %1498 = vmatprep.subr.mxu0 0.0
    %1499 = vmatpush1.msra.mxu0 %v1406
    %1500 = vmatprep.subr.mxu0 0.0
    %1501 = vmatpush1.msra.mxu0 %v1407
    %1502 = vmatprep.subr.mxu0 0.0
    %1503 = vmatpush1.msra.mxu0 %v1408
    %1504 = vmatprep.subr.mxu0 0.0
    %1505 = vmatpush1.msra.mxu0 %v1409
    %1506 = vmatprep.subr.mxu0 0.0
    %1507 = vmatpush1.msra.mxu0 %v1410
    %1508 = vmatprep.subr.mxu0 0.0
    %1509 = vmatpush1.msra.mxu0 %v1411
    %1510 = vmatprep.subr.mxu0 0.0
    %1511 = vmatpush1.msra.mxu0 %v1412
    %1512 = vmatprep.subr.mxu0 0.0
    %1513 = vmatpush1.msra.mxu0 %v1413
    %1514 = vmatprep.subr.mxu0 0.0
    %1515 = vmatpush1.msra.mxu0 0.0
    %1516 = vmatprep.subr.mxu0 0.0
    %1517 = vmatpush1.msra.mxu0 0.0
    %1518 = vmatprep.subr.mxu0 0.0
    %1519 = vmatpush1.msra.mxu0 0.0
    %1520 = vmatprep.subr.mxu0 0.0
    %1521 = vmatpush1.msra.mxu0 0.0
    %1522 = vmatprep.subr.mxu0 0.0
    %1523 = vmatpush1.msra.mxu0 0.0
    %1524 = vmatprep.subr.mxu0 0.0
    %1525 = vmatpush1.msra.mxu0 0.0
    %1526 = vmatprep.subr.mxu0 0.0
    %1527 = vmatpush1.msra.mxu0 0.0
    %1528 = vmatprep.subr.mxu0 0.0
    %1529 = vmatpush1.msra.mxu0 0.0
    %1530 = vmatprep.subr.mxu0 0.0
    %1531 = vmatpush1.msra.mxu0 0.0
    %1532 = vmatprep.subr.mxu0 0.0
    %1533 = vmatpush1.msra.mxu0 0.0
    %1534 = vmatprep.subr.mxu0 0.0
    %1535 = vmatpush1.msra.mxu0 0.0
    %1536 = vmatprep.subr.mxu0 0.0
    %1537 = vmatpush1.msra.mxu0 0.0
    %1538 = vmatprep.subr.mxu0 0.0
    %1539 = vmatpush1.msra.mxu0 0.0
    %1540 = vmatprep.subr.mxu0 0.0
    %1541 = vmatpush1.msra.mxu0 0.0
    %1542 = vmatprep.subr.mxu0 0.0
    %1543 = vmatpush1.msra.mxu0 0.0
    %1544 = vmatprep.subr.mxu0 0.0
    %1545 = vmatpush1.msra.mxu0 0.0
    %1546 = vmatprep.subr.mxu0 0.0
    %1547 = vmatpush1.msra.mxu0 0.0
    %1548 = vmatprep.subr.mxu0 0.0
    %1549 = vmatpush1.msra.mxu0 0.0
    %1550 = vmatprep.subr.mxu0 0.0
    %1551 = vmatpush1.msra.mxu0 0.0
    %1552 = vmatprep.subr.mxu0 0.0
    %1553 = vmatpush1.msra.mxu0 0.0
    %1554 = vmatprep.subr.mxu0 0.0
    %1555 = vmatpush1.msra.mxu0 0.0
    %1556 = vmatprep.subr.mxu0 0.0
    %1557 = vmatpush1.msra.mxu0 0.0
    %1558 = vmatprep.subr.mxu0 0.0
    %1559 = vmatpush1.msra.mxu0 0.0
    %1560 = vmatprep.subr.mxu0 0.0
    %1561 = vmatpush1.msra.mxu0 0.0
    %1562 = vmatprep.mubr.f32.mxu0 0.0
    %1563 = vmatmul.mubr.f32.gmra.mrb[0].mxu0 %v1496
    %v1564 = vpop.f32.mrb[0].mxu0
    %v1565 = vadd.f32 %v1492, %v1564
    %v1566 = vpop.f32.mrb[0].mxu0
    %1567 = vdwg.mxu0
    %v1568 = vld [vmem:[#allocation19] sm:$0x1]
    %v1570 = vlaneseq
    %v1571 = vshrl.u32 %v1570, 7
    %v1572 = vsub.s32 0, %v1571
    %v1573 = vrot.slane %v1568, %v1572
    %v1575 = vadd.f32 %v1565, %v1573
    %v1576 = vlaneseq
    %v1577 = vand.u32 %v1576, 127
    %vm1578 = vcmp.lt.s32.totalorder %v1577, 2
    %v1579 = vsel %vm1578, %v1575, -1e+30
    %1580 = vmax.xlane.f32.xlu0 %v1579
    %v1581 = vpop.xlane.xlu0 %1580
    %v1582 = vsub.f32 %v1579, %v1581
    %v1583 = vmul.f32 %v1582, 1.442695
    %v1584 = vpow.pop %v1583
    %1585 = vadd.xlane.f32.xlu0 %v1584
    %v1586 = vpop.xlane.xlu0 %1585
    %v1587 = vrcp.pop %v1586
    %v1588 = vmul.f32 %v1584, %v1587
    %1589 = vst [vmem:[#allocation20] sm:$0xff] %v1588
    // Predicated region
    $region94: #{tpu_custom_call.1} parent=1 // pred_check
      _
    $region95: #{tpu_custom_call.1} parent=1 // pred_check_branch
      %1591 = sbr.rel (0) target = $region97
    $region96: #{tpu_custom_call.1} parent=1 // pred_region
      %s1593 = ssub.s32 128, 128
      %1594 = vsyncadd [#allocation4], %s1593
      %s1596 = sshll.u32 [#allocation20], 4
      %s1597 = int_to_ptr.vmem [resolvable:$true] %s1596
      %1599 = dma.vmem_to_hbm [thread:$0]  %s1597, 128, %s12, [#allocation4]
    $region97: #{tpu_custom_call.1} parent=1 // pred_fallthru
      _
    // Predicated region
    $region98: #{tpu_custom_call.1} parent=1 // pred_check
      _
    $region99: #{tpu_custom_call.1} parent=1 // pred_check_branch
      %1601 = sbr.rel (0) target = $region101
    $region100: #{tpu_custom_call.1} parent=1 // pred_region
      %1602 = dma.done [#allocation4], 128
    $region101: #{tpu_custom_call.1} parent=1 // pred_fallthru
      _
    %1603 = vsyncpa [#allocation3], 1
    %1604 = vsyncpa [#allocation6], 1
    %1605 = vsyncpa [#allocation9], 1
    %1606 = vsyncpa [#allocation12], 1
    %1607 = vsyncpa [#allocation15], 1
    %1608 = vsyncpa [#allocation18], 1
    %1609 = vsyncpa [#allocation4], 1

</llo_original>
